<compile_context>
chip_gen: v5e
topology: v5e:2x2
jax: 0.10.0
libtpu: 0.0.40
codegen_flags: <defaults>
</compile_context>

<pallas_src>
import jax
import jax.numpy as jnp
import numpy as np
from jax.experimental import pallas as pl
from jax.experimental.pallas import tpu as pltpu

_LANE = 128
_MAX_TILE = 2048  # frames per grid step (lanes); data is tiny, VMEM is never a concern


def _batched_pose_kernel(local_ref, a_ref, e_ref, wf_ref, lf_ref):
    """Batched 4x4 pose composition, batch in lanes.

    local_ref : (16,) f32 in SMEM  — flattened local_frame_pose (row-major).
    a_ref     : (16, T) f32        — per-frame keyframe pose, flattened, frames in lanes.
    e_ref     : (16, T) f32        — per-frame estimated pose, flattened, frames in lanes.
    wf_ref    : (16, T) f32        — out: keyframe @ est   (per frame).
    lf_ref    : (16, T) f32        — out: local @ wf       (per frame).
    """
    a = a_ref[...]   # (16, T)
    e = e_ref[...]   # (16, T)

    # wf[i, j] = sum_m kf[i, m] * est[m, j]   (per lane / per frame)
    wf_rows = [None] * 16
    for i in range(4):
        for j in range(4):
            acc = a[4 * i:4 * i + 1, :] * e[j:j + 1, :]
            for m in range(1, 4):
                acc = acc + a[4 * i + m:4 * i + m + 1, :] * e[4 * m + j:4 * m + j + 1, :]
            wf_rows[4 * i + j] = acc
            wf_ref[4 * i + j:4 * i + j + 1, :] = acc

    # lf[i, j] = sum_m local[i, m] * wf[m, j]  — same association as the reference
    # (local @ (kf @ est)); local entries are SMEM scalars broadcast over lanes.
    for i in range(4):
        for j in range(4):
            acc = local_ref[4 * i] * wf_rows[j]
            for m in range(1, 4):
                acc = acc + local_ref[4 * i + m] * wf_rows[4 * m + j]
            lf_ref[4 * i + j:4 * i + j + 1, :] = acc


def reverse_pose_to_world_frame(batch, keyframe_pose_mat, *,
                                keyframe_period: int,
                                train_outlier_model: bool = True):
    if train_outlier_model:
        estimated_poses = batch['pose_matrix_estimate']
    else:
        estimated_poses = batch['pose_matrix_estimate_opencv']

    estimated_poses = estimated_poses.astype(jnp.float32)
    keyframe_pose_mat = keyframe_pose_mat.astype(jnp.float32)
    B = estimated_poses.shape[0]

    # ---- glue: local_frame_pose = inverse of the keyframe SE(3): (R^T, -R^T t) ----
    R = keyframe_pose_mat[:3, :3]
    t = keyframe_pose_mat[:3, 3:4]
    Rt = R.T
    local_frame_pose = keyframe_pose_mat
    local_frame_pose = local_frame_pose.at[:3, :3].set(Rt)
    local_frame_pose = local_frame_pose.at[:3, 3:4].set(-(Rt @ t))

    # ---- irreducibly-serial part: keyframe chain over boundary frames (tiny lax.scan) ----
    G = (B - 1) // keyframe_period + 1            # number of distinct keyframe poses used
    if G > 1:
        bidx = jnp.arange(1, G) * keyframe_period - 1
        boundary_est = estimated_poses[bidx]      # (G-1, 4, 4)

        def step(kf, e):
            kf_new = jnp.dot(kf, e, preferred_element_type=jnp.float32)
            return kf_new, kf_new

        _, kf_tail = jax.lax.scan(step, keyframe_pose_mat, boundary_est)
        kf_all = jnp.concatenate([keyframe_pose_mat[None], kf_tail], axis=0)  # (G, 4, 4)
    else:
        kf_all = keyframe_pose_mat[None]

    group = jnp.arange(B) // keyframe_period
    kf_per_frame = kf_all[group]                  # (B, 4, 4) gather in XLA

    # ---- lane-dense layout: batch in lanes, 16 flattened matrix entries in sublanes ----
    tile = min(_MAX_TILE, ((B + _LANE - 1) // _LANE) * _LANE)
    b_pad = ((B + tile - 1) // tile) * tile
    grid = (b_pad // tile,)

    def to_lane_major(x):
        x = x.reshape(B, 16).T                    # (16, B), [4i+j, b] = x[b, i, j]
        return jnp.pad(x, ((0, 0), (0, b_pad - B)))

    a_t = to_lane_major(kf_per_frame)
    e_t = to_lane_major(estimated_poses)
    local_flat = local_frame_pose.reshape(16)

    wf_t, lf_t = pl.pallas_call(
        _batched_pose_kernel,
        out_shape=(jax.ShapeDtypeStruct((16, b_pad), jnp.float32),
                   jax.ShapeDtypeStruct((16, b_pad), jnp.float32)),
        grid_spec=pltpu.PrefetchScalarGridSpec(
            num_scalar_prefetch=0,
            grid=grid,
            in_specs=[
                pl.BlockSpec(memory_space=pltpu.MemorySpace.SMEM),   # local_frame_pose (16,)
                pl.BlockSpec((16, tile), lambda b: (0, b)),          # per-frame keyframe
                pl.BlockSpec((16, tile), lambda b: (0, b)),          # per-frame estimate
            ],
            out_specs=[
                pl.BlockSpec((16, tile), lambda b: (0, b)),          # wf
                pl.BlockSpec((16, tile), lambda b: (0, b)),          # lf
            ],
        ),
        compiler_params=pltpu.CompilerParams(
            # no cross-step carry anymore -> batch axis is parallel (v7x megacore).
            dimension_semantics=("parallel",)),
    )(local_flat, a_t, e_t)

    wf = wf_t[:, :B].T.reshape(B, 4, 4)
    lf = lf_t[:, :B].T.reshape(B, 4, 4)
    return {'pose_matrix_estimate_wf': wf, 'pose_matrix_estimate_lf': lf}


# ---------------- pure-numpy reference (mirrors the torch loop) ----------------
def _reference(batch, keyframe_pose_mat, *, keyframe_period, train_outlier_model=True):
    est = np.asarray(batch['pose_matrix_estimate'] if train_outlier_model
                     else batch['pose_matrix_estimate_opencv'], dtype=np.float32)
    kf = np.asarray(keyframe_pose_mat, dtype=np.float32).copy()
    B = est.shape[0]
    wf = np.zeros((B, 4, 4), dtype=np.float32)
    for k in range(B):
        cam_wf = kf @ est[k]
        wf[k] = cam_wf
        if not (k + 1) % keyframe_period:
            kf = cam_wf
    local = np.asarray(keyframe_pose_mat, dtype=np.float32).copy()
    local[:3, :3] = local[:3, :3].T
    local[:3, 3:4] = -local[:3, :3] @ local[:3, 3:4]
    lf = np.einsum('ij,bjk->bik', local, wf)
    return wf, lf


if __name__ == "__main__":
    key = jax.random.PRNGKey(0)
    k1, k2 = jax.random.split(key)

    B = 8
    keyframe_period = 3

    # Deterministic synthetic SE(3)-like poses (random 4x4 with [0,0,0,1] bottom row).
    def make_poses(k, n):
        m = jax.random.normal(k, (n, 4, 4), dtype=jnp.float32)
        bottom = jnp.tile(jnp.array([[0., 0., 0., 1.]], jnp.float32), (n, 1))
        return m.at[:, 3, :].set(bottom)

    estimated_poses = make_poses(k1, B)
    keyframe_pose_mat = make_poses(k2, 1)[0]

    batch = {'pose_matrix_estimate': estimated_poses}

    out = reverse_pose_to_world_frame(batch, keyframe_pose_mat,
                                      keyframe_period=keyframe_period,
                                      train_outlier_model=True)
    jax.block_until_ready(out)

    wf_ref, lf_ref = _reference(batch, keyframe_pose_mat,
                                keyframe_period=keyframe_period)
    assert np.allclose(np.asarray(out['pose_matrix_estimate_wf']), wf_ref,
                       rtol=1e-4, atol=1e-4)
    assert np.allclose(np.asarray(out['pose_matrix_estimate_lf']), lf_ref,
                       rtol=1e-4, atol=1e-4)

    print("KERNEL_OK")
</pallas_src>

<mosaic_0001>
module attributes {stable_mosaic.version = 11 : i64} {
  func.func @_batched_pose_kernel(%arg0: i32, %arg1: memref<16xf32, #tpu.memory_space<smem>>, %arg2: memref<16x128xf32, #tpu.memory_space<vmem>>, %arg3: memref<16x128xf32, #tpu.memory_space<vmem>>, %arg4: memref<16x128xf32, #tpu.memory_space<vmem>>, %arg5: memref<16x128xf32, #tpu.memory_space<vmem>>) attributes {dimension_semantics = [#tpu.dimension_semantics<parallel>], iteration_bounds = array<i64: 1>, scalar_prefetch = 0 : i64, scratch_operands = 0 : i64, tpu.core_type = #tpu.core_type<tc>, window_params = [{transform_indices = @transform_0, window_bounds = array<i64: 16>}, {transform_indices = @transform_1, window_bounds = array<i64: 16, 128>}, {transform_indices = @transform_2, window_bounds = array<i64: 16, 128>}, {transform_indices = @transform_3, window_bounds = array<i64: 16, 128>}, {transform_indices = @transform_4, window_bounds = array<i64: 16, 128>}]} {
    %c0 = arith.constant 0 : index
    %c0_0 = arith.constant 0 : index
    %0 = vector.load %arg2[%c0, %c0_0] : memref<16x128xf32, #tpu.memory_space<vmem>>, vector<16x128xf32>
    %c0_1 = arith.constant 0 : index
    %c0_2 = arith.constant 0 : index
    %1 = vector.load %arg3[%c0_1, %c0_2] : memref<16x128xf32, #tpu.memory_space<vmem>>, vector<16x128xf32>
    %2 = vector.extract_strided_slice %0 {offsets = [0, 0], sizes = [1, 128], strides = [1, 1]} : vector<16x128xf32> to vector<1x128xf32>
    %3 = vector.extract_strided_slice %1 {offsets = [0, 0], sizes = [1, 128], strides = [1, 1]} : vector<16x128xf32> to vector<1x128xf32>
    %4 = arith.mulf %2, %3 : vector<1x128xf32>
    %5 = vector.extract_strided_slice %0 {offsets = [1, 0], sizes = [1, 128], strides = [1, 1]} : vector<16x128xf32> to vector<1x128xf32>
    %6 = vector.extract_strided_slice %1 {offsets = [4, 0], sizes = [1, 128], strides = [1, 1]} : vector<16x128xf32> to vector<1x128xf32>
    %7 = arith.mulf %5, %6 : vector<1x128xf32>
    %8 = arith.addf %4, %7 : vector<1x128xf32>
    %9 = vector.extract_strided_slice %0 {offsets = [2, 0], sizes = [1, 128], strides = [1, 1]} : vector<16x128xf32> to vector<1x128xf32>
    %10 = vector.extract_strided_slice %1 {offsets = [8, 0], sizes = [1, 128], strides = [1, 1]} : vector<16x128xf32> to vector<1x128xf32>
    %11 = arith.mulf %9, %10 : vector<1x128xf32>
    %12 = arith.addf %8, %11 : vector<1x128xf32>
    %13 = vector.extract_strided_slice %0 {offsets = [3, 0], sizes = [1, 128], strides = [1, 1]} : vector<16x128xf32> to vector<1x128xf32>
    %14 = vector.extract_strided_slice %1 {offsets = [12, 0], sizes = [1, 128], strides = [1, 1]} : vector<16x128xf32> to vector<1x128xf32>
    %15 = arith.mulf %13, %14 : vector<1x128xf32>
    %16 = arith.addf %12, %15 : vector<1x128xf32>
    %c0_3 = arith.constant 0 : index
    %c0_4 = arith.constant 0 : index
    %17 = vector.load %arg4[%c0_3, %c0_4] : memref<16x128xf32, #tpu.memory_space<vmem>>, vector<1x128xf32>
    tpu.vector_store %arg4[%c0_3, %c0_4], %16 {strides = array<i32>} : memref<16x128xf32, #tpu.memory_space<vmem>>, vector<1x128xf32>,
    %18 = vector.extract_strided_slice %0 {offsets = [0, 0], sizes = [1, 128], strides = [1, 1]} : vector<16x128xf32> to vector<1x128xf32>
    %19 = vector.extract_strided_slice %1 {offsets = [1, 0], sizes = [1, 128], strides = [1, 1]} : vector<16x128xf32> to vector<1x128xf32>
    %20 = arith.mulf %18, %19 : vector<1x128xf32>
    %21 = vector.extract_strided_slice %0 {offsets = [1, 0], sizes = [1, 128], strides = [1, 1]} : vector<16x128xf32> to vector<1x128xf32>
    %22 = vector.extract_strided_slice %1 {offsets = [5, 0], sizes = [1, 128], strides = [1, 1]} : vector<16x128xf32> to vector<1x128xf32>
    %23 = arith.mulf %21, %22 : vector<1x128xf32>
    %24 = arith.addf %20, %23 : vector<1x128xf32>
    %25 = vector.extract_strided_slice %0 {offsets = [2, 0], sizes = [1, 128], strides = [1, 1]} : vector<16x128xf32> to vector<1x128xf32>
    %26 = vector.extract_strided_slice %1 {offsets = [9, 0], sizes = [1, 128], strides = [1, 1]} : vector<16x128xf32> to vector<1x128xf32>
    %27 = arith.mulf %25, %26 : vector<1x128xf32>
    %28 = arith.addf %24, %27 : vector<1x128xf32>
    %29 = vector.extract_strided_slice %0 {offsets = [3, 0], sizes = [1, 128], strides = [1, 1]} : vector<16x128xf32> to vector<1x128xf32>
    %30 = vector.extract_strided_slice %1 {offsets = [13, 0], sizes = [1, 128], strides = [1, 1]} : vector<16x128xf32> to vector<1x128xf32>
    %31 = arith.mulf %29, %30 : vector<1x128xf32>
    %32 = arith.addf %28, %31 : vector<1x128xf32>
    %c1 = arith.constant 1 : index
    %c0_5 = arith.constant 0 : index
    %33 = vector.load %arg4[%c1, %c0_5] : memref<16x128xf32, #tpu.memory_space<vmem>>, vector<1x128xf32>
    tpu.vector_store %arg4[%c1, %c0_5], %32 {strides = array<i32>} : memref<16x128xf32, #tpu.memory_space<vmem>>, vector<1x128xf32>,
    %34 = vector.extract_strided_slice %0 {offsets = [0, 0], sizes = [1, 128], strides = [1, 1]} : vector<16x128xf32> to vector<1x128xf32>
    %35 = vector.extract_strided_slice %1 {offsets = [2, 0], sizes = [1, 128], strides = [1, 1]} : vector<16x128xf32> to vector<1x128xf32>
    %36 = arith.mulf %34, %35 : vector<1x128xf32>
    %37 = vector.extract_strided_slice %0 {offsets = [1, 0], sizes = [1, 128], strides = [1, 1]} : vector<16x128xf32> to vector<1x128xf32>
    %38 = vector.extract_strided_slice %1 {offsets = [6, 0], sizes = [1, 128], strides = [1, 1]} : vector<16x128xf32> to vector<1x128xf32>
    %39 = arith.mulf %37, %38 : vector<1x128xf32>
    %40 = arith.addf %36, %39 : vector<1x128xf32>
    %41 = vector.extract_strided_slice %0 {offsets = [2, 0], sizes = [1, 128], strides = [1, 1]} : vector<16x128xf32> to vector<1x128xf32>
    %42 = vector.extract_strided_slice %1 {offsets = [10, 0], sizes = [1, 128], strides = [1, 1]} : vector<16x128xf32> to vector<1x128xf32>
    %43 = arith.mulf %41, %42 : vector<1x128xf32>
    %44 = arith.addf %40, %43 : vector<1x128xf32>
    %45 = vector.extract_strided_slice %0 {offsets = [3, 0], sizes = [1, 128], strides = [1, 1]} : vector<16x128xf32> to vector<1x128xf32>
    %46 = vector.extract_strided_slice %1 {offsets = [14, 0], sizes = [1, 128], strides = [1, 1]} : vector<16x128xf32> to vector<1x128xf32>
    %47 = arith.mulf %45, %46 : vector<1x128xf32>
    %48 = arith.addf %44, %47 : vector<1x128xf32>
    %c2 = arith.constant 2 : index
    %c0_6 = arith.constant 0 : index
    %49 = vector.load %arg4[%c2, %c0_6] : memref<16x128xf32, #tpu.memory_space<vmem>>, vector<1x128xf32>
    tpu.vector_store %arg4[%c2, %c0_6], %48 {strides = array<i32>} : memref<16x128xf32, #tpu.memory_space<vmem>>, vector<1x128xf32>,
    %50 = vector.extract_strided_slice %0 {offsets = [0, 0], sizes = [1, 128], strides = [1, 1]} : vector<16x128xf32> to vector<1x128xf32>
    %51 = vector.extract_strided_slice %1 {offsets = [3, 0], sizes = [1, 128], strides = [1, 1]} : vector<16x128xf32> to vector<1x128xf32>
    %52 = arith.mulf %50, %51 : vector<1x128xf32>
    %53 = vector.extract_strided_slice %0 {offsets = [1, 0], sizes = [1, 128], strides = [1, 1]} : vector<16x128xf32> to vector<1x128xf32>
    %54 = vector.extract_strided_slice %1 {offsets = [7, 0], sizes = [1, 128], strides = [1, 1]} : vector<16x128xf32> to vector<1x128xf32>
    %55 = arith.mulf %53, %54 : vector<1x128xf32>
    %56 = arith.addf %52, %55 : vector<1x128xf32>
    %57 = vector.extract_strided_slice %0 {offsets = [2, 0], sizes = [1, 128], strides = [1, 1]} : vector<16x128xf32> to vector<1x128xf32>
    %58 = vector.extract_strided_slice %1 {offsets = [11, 0], sizes = [1, 128], strides = [1, 1]} : vector<16x128xf32> to vector<1x128xf32>
    %59 = arith.mulf %57, %58 : vector<1x128xf32>
    %60 = arith.addf %56, %59 : vector<1x128xf32>
    %61 = vector.extract_strided_slice %0 {offsets = [3, 0], sizes = [1, 128], strides = [1, 1]} : vector<16x128xf32> to vector<1x128xf32>
    %62 = vector.extract_strided_slice %1 {offsets = [15, 0], sizes = [1, 128], strides = [1, 1]} : vector<16x128xf32> to vector<1x128xf32>
    %63 = arith.mulf %61, %62 : vector<1x128xf32>
    %64 = arith.addf %60, %63 : vector<1x128xf32>
    %c3 = arith.constant 3 : index
    %c0_7 = arith.constant 0 : index
    %65 = vector.load %arg4[%c3, %c0_7] : memref<16x128xf32, #tpu.memory_space<vmem>>, vector<1x128xf32>
    tpu.vector_store %arg4[%c3, %c0_7], %64 {strides = array<i32>} : memref<16x128xf32, #tpu.memory_space<vmem>>, vector<1x128xf32>,
    %66 = vector.extract_strided_slice %0 {offsets = [4, 0], sizes = [1, 128], strides = [1, 1]} : vector<16x128xf32> to vector<1x128xf32>
    %67 = vector.extract_strided_slice %1 {offsets = [0, 0], sizes = [1, 128], strides = [1, 1]} : vector<16x128xf32> to vector<1x128xf32>
    %68 = arith.mulf %66, %67 : vector<1x128xf32>
    %69 = vector.extract_strided_slice %0 {offsets = [5, 0], sizes = [1, 128], strides = [1, 1]} : vector<16x128xf32> to vector<1x128xf32>
    %70 = vector.extract_strided_slice %1 {offsets = [4, 0], sizes = [1, 128], strides = [1, 1]} : vector<16x128xf32> to vector<1x128xf32>
    %71 = arith.mulf %69, %70 : vector<1x128xf32>
    %72 = arith.addf %68, %71 : vector<1x128xf32>
    %73 = vector.extract_strided_slice %0 {offsets = [6, 0], sizes = [1, 128], strides = [1, 1]} : vector<16x128xf32> to vector<1x128xf32>
    %74 = vector.extract_strided_slice %1 {offsets = [8, 0], sizes = [1, 128], strides = [1, 1]} : vector<16x128xf32> to vector<1x128xf32>
    %75 = arith.mulf %73, %74 : vector<1x128xf32>
    %76 = arith.addf %72, %75 : vector<1x128xf32>
    %77 = vector.extract_strided_slice %0 {offsets = [7, 0], sizes = [1, 128], strides = [1, 1]} : vector<16x128xf32> to vector<1x128xf32>
    %78 = vector.extract_strided_slice %1 {offsets = [12, 0], sizes = [1, 128], strides = [1, 1]} : vector<16x128xf32> to vector<1x128xf32>
    %79 = arith.mulf %77, %78 : vector<1x128xf32>
    %80 = arith.addf %76, %79 : vector<1x128xf32>
    %c4 = arith.constant 4 : index
    %c0_8 = arith.constant 0 : index
    %81 = vector.load %arg4[%c4, %c0_8] : memref<16x128xf32, #tpu.memory_space<vmem>>, vector<1x128xf32>
    tpu.vector_store %arg4[%c4, %c0_8], %80 {strides = array<i32>} : memref<16x128xf32, #tpu.memory_space<vmem>>, vector<1x128xf32>,
    %82 = vector.extract_strided_slice %0 {offsets = [4, 0], sizes = [1, 128], strides = [1, 1]} : vector<16x128xf32> to vector<1x128xf32>
    %83 = vector.extract_strided_slice %1 {offsets = [1, 0], sizes = [1, 128], strides = [1, 1]} : vector<16x128xf32> to vector<1x128xf32>
    %84 = arith.mulf %82, %83 : vector<1x128xf32>
    %85 = vector.extract_strided_slice %0 {offsets = [5, 0], sizes = [1, 128], strides = [1, 1]} : vector<16x128xf32> to vector<1x128xf32>
    %86 = vector.extract_strided_slice %1 {offsets = [5, 0], sizes = [1, 128], strides = [1, 1]} : vector<16x128xf32> to vector<1x128xf32>
    %87 = arith.mulf %85, %86 : vector<1x128xf32>
    %88 = arith.addf %84, %87 : vector<1x128xf32>
    %89 = vector.extract_strided_slice %0 {offsets = [6, 0], sizes = [1, 128], strides = [1, 1]} : vector<16x128xf32> to vector<1x128xf32>
    %90 = vector.extract_strided_slice %1 {offsets = [9, 0], sizes = [1, 128], strides = [1, 1]} : vector<16x128xf32> to vector<1x128xf32>
    %91 = arith.mulf %89, %90 : vector<1x128xf32>
    %92 = arith.addf %88, %91 : vector<1x128xf32>
    %93 = vector.extract_strided_slice %0 {offsets = [7, 0], sizes = [1, 128], strides = [1, 1]} : vector<16x128xf32> to vector<1x128xf32>
    %94 = vector.extract_strided_slice %1 {offsets = [13, 0], sizes = [1, 128], strides = [1, 1]} : vector<16x128xf32> to vector<1x128xf32>
    %95 = arith.mulf %93, %94 : vector<1x128xf32>
    %96 = arith.addf %92, %95 : vector<1x128xf32>
    %c5 = arith.constant 5 : index
    %c0_9 = arith.constant 0 : index
    %97 = vector.load %arg4[%c5, %c0_9] : memref<16x128xf32, #tpu.memory_space<vmem>>, vector<1x128xf32>
    tpu.vector_store %arg4[%c5, %c0_9], %96 {strides = array<i32>} : memref<16x128xf32, #tpu.memory_space<vmem>>, vector<1x128xf32>,
    %98 = vector.extract_strided_slice %0 {offsets = [4, 0], sizes = [1, 128], strides = [1, 1]} : vector<16x128xf32> to vector<1x128xf32>
    %99 = vector.extract_strided_slice %1 {offsets = [2, 0], sizes = [1, 128], strides = [1, 1]} : vector<16x128xf32> to vector<1x128xf32>
    %100 = arith.mulf %98, %99 : vector<1x128xf32>
    %101 = vector.extract_strided_slice %0 {offsets = [5, 0], sizes = [1, 128], strides = [1, 1]} : vector<16x128xf32> to vector<1x128xf32>
    %102 = vector.extract_strided_slice %1 {offsets = [6, 0], sizes = [1, 128], strides = [1, 1]} : vector<16x128xf32> to vector<1x128xf32>
    %103 = arith.mulf %101, %102 : vector<1x128xf32>
    %104 = arith.addf %100, %103 : vector<1x128xf32>
    %105 = vector.extract_strided_slice %0 {offsets = [6, 0], sizes = [1, 128], strides = [1, 1]} : vector<16x128xf32> to vector<1x128xf32>
    %106 = vector.extract_strided_slice %1 {offsets = [10, 0], sizes = [1, 128], strides = [1, 1]} : vector<16x128xf32> to vector<1x128xf32>
    %107 = arith.mulf %105, %106 : vector<1x128xf32>
    %108 = arith.addf %104, %107 : vector<1x128xf32>
    %109 = vector.extract_strided_slice %0 {offsets = [7, 0], sizes = [1, 128], strides = [1, 1]} : vector<16x128xf32> to vector<1x128xf32>
    %110 = vector.extract_strided_slice %1 {offsets = [14, 0], sizes = [1, 128], strides = [1, 1]} : vector<16x128xf32> to vector<1x128xf32>
    %111 = arith.mulf %109, %110 : vector<1x128xf32>
    %112 = arith.addf %108, %111 : vector<1x128xf32>
    %c6 = arith.constant 6 : index
    %c0_10 = arith.constant 0 : index
    %113 = vector.load %arg4[%c6, %c0_10] : memref<16x128xf32, #tpu.memory_space<vmem>>, vector<1x128xf32>
    tpu.vector_store %arg4[%c6, %c0_10], %112 {strides = array<i32>} : memref<16x128xf32, #tpu.memory_space<vmem>>, vector<1x128xf32>,
    %114 = vector.extract_strided_slice %0 {offsets = [4, 0], sizes = [1, 128], strides = [1, 1]} : vector<16x128xf32> to vector<1x128xf32>
    %115 = vector.extract_strided_slice %1 {offsets = [3, 0], sizes = [1, 128], strides = [1, 1]} : vector<16x128xf32> to vector<1x128xf32>
    %116 = arith.mulf %114, %115 : vector<1x128xf32>
    %117 = vector.extract_strided_slice %0 {offsets = [5, 0], sizes = [1, 128], strides = [1, 1]} : vector<16x128xf32> to vector<1x128xf32>
    %118 = vector.extract_strided_slice %1 {offsets = [7, 0], sizes = [1, 128], strides = [1, 1]} : vector<16x128xf32> to vector<1x128xf32>
    %119 = arith.mulf %117, %118 : vector<1x128xf32>
    %120 = arith.addf %116, %119 : vector<1x128xf32>
    %121 = vector.extract_strided_slice %0 {offsets = [6, 0], sizes = [1, 128], strides = [1, 1]} : vector<16x128xf32> to vector<1x128xf32>
    %122 = vector.extract_strided_slice %1 {offsets = [11, 0], sizes = [1, 128], strides = [1, 1]} : vector<16x128xf32> to vector<1x128xf32>
    %123 = arith.mulf %121, %122 : vector<1x128xf32>
    %124 = arith.addf %120, %123 : vector<1x128xf32>
    %125 = vector.extract_strided_slice %0 {offsets = [7, 0], sizes = [1, 128], strides = [1, 1]} : vector<16x128xf32> to vector<1x128xf32>
    %126 = vector.extract_strided_slice %1 {offsets = [15, 0], sizes = [1, 128], strides = [1, 1]} : vector<16x128xf32> to vector<1x128xf32>
    %127 = arith.mulf %125, %126 : vector<1x128xf32>
    %128 = arith.addf %124, %127 : vector<1x128xf32>
    %c7 = arith.constant 7 : index
    %c0_11 = arith.constant 0 : index
    %129 = vector.load %arg4[%c7, %c0_11] : memref<16x128xf32, #tpu.memory_space<vmem>>, vector<1x128xf32>
    tpu.vector_store %arg4[%c7, %c0_11], %128 {strides = array<i32>} : memref<16x128xf32, #tpu.memory_space<vmem>>, vector<1x128xf32>,
    %130 = vector.extract_strided_slice %0 {offsets = [8, 0], sizes = [1, 128], strides = [1, 1]} : vector<16x128xf32> to vector<1x128xf32>
    %131 = vector.extract_strided_slice %1 {offsets = [0, 0], sizes = [1, 128], strides = [1, 1]} : vector<16x128xf32> to vector<1x128xf32>
    %132 = arith.mulf %130, %131 : vector<1x128xf32>
    %133 = vector.extract_strided_slice %0 {offsets = [9, 0], sizes = [1, 128], strides = [1, 1]} : vector<16x128xf32> to vector<1x128xf32>
    %134 = vector.extract_strided_slice %1 {offsets = [4, 0], sizes = [1, 128], strides = [1, 1]} : vector<16x128xf32> to vector<1x128xf32>
    %135 = arith.mulf %133, %134 : vector<1x128xf32>
    %136 = arith.addf %132, %135 : vector<1x128xf32>
    %137 = vector.extract_strided_slice %0 {offsets = [10, 0], sizes = [1, 128], strides = [1, 1]} : vector<16x128xf32> to vector<1x128xf32>
    %138 = vector.extract_strided_slice %1 {offsets = [8, 0], sizes = [1, 128], strides = [1, 1]} : vector<16x128xf32> to vector<1x128xf32>
    %139 = arith.mulf %137, %138 : vector<1x128xf32>
    %140 = arith.addf %136, %139 : vector<1x128xf32>
    %141 = vector.extract_strided_slice %0 {offsets = [11, 0], sizes = [1, 128], strides = [1, 1]} : vector<16x128xf32> to vector<1x128xf32>
    %142 = vector.extract_strided_slice %1 {offsets = [12, 0], sizes = [1, 128], strides = [1, 1]} : vector<16x128xf32> to vector<1x128xf32>
    %143 = arith.mulf %141, %142 : vector<1x128xf32>
    %144 = arith.addf %140, %143 : vector<1x128xf32>
    %c8 = arith.constant 8 : index
    %c0_12 = arith.constant 0 : index
    %145 = vector.load %arg4[%c8, %c0_12] : memref<16x128xf32, #tpu.memory_space<vmem>>, vector<1x128xf32>
    tpu.vector_store %arg4[%c8, %c0_12], %144 {strides = array<i32>} : memref<16x128xf32, #tpu.memory_space<vmem>>, vector<1x128xf32>,
    %146 = vector.extract_strided_slice %0 {offsets = [8, 0], sizes = [1, 128], strides = [1, 1]} : vector<16x128xf32> to vector<1x128xf32>
    %147 = vector.extract_strided_slice %1 {offsets = [1, 0], sizes = [1, 128], strides = [1, 1]} : vector<16x128xf32> to vector<1x128xf32>
    %148 = arith.mulf %146, %147 : vector<1x128xf32>
    %149 = vector.extract_strided_slice %0 {offsets = [9, 0], sizes = [1, 128], strides = [1, 1]} : vector<16x128xf32> to vector<1x128xf32>
    %150 = vector.extract_strided_slice %1 {offsets = [5, 0], sizes = [1, 128], strides = [1, 1]} : vector<16x128xf32> to vector<1x128xf32>
    %151 = arith.mulf %149, %150 : vector<1x128xf32>
    %152 = arith.addf %148, %151 : vector<1x128xf32>
    %153 = vector.extract_strided_slice %0 {offsets = [10, 0], sizes = [1, 128], strides = [1, 1]} : vector<16x128xf32> to vector<1x128xf32>
    %154 = vector.extract_strided_slice %1 {offsets = [9, 0], sizes = [1, 128], strides = [1, 1]} : vector<16x128xf32> to vector<1x128xf32>
    %155 = arith.mulf %153, %154 : vector<1x128xf32>
    %156 = arith.addf %152, %155 : vector<1x128xf32>
    %157 = vector.extract_strided_slice %0 {offsets = [11, 0], sizes = [1, 128], strides = [1, 1]} : vector<16x128xf32> to vector<1x128xf32>
    %158 = vector.extract_strided_slice %1 {offsets = [13, 0], sizes = [1, 128], strides = [1, 1]} : vector<16x128xf32> to vector<1x128xf32>
    %159 = arith.mulf %157, %158 : vector<1x128xf32>
    %160 = arith.addf %156, %159 : vector<1x128xf32>
    %c9 = arith.constant 9 : index
    %c0_13 = arith.constant 0 : index
    %161 = vector.load %arg4[%c9, %c0_13] : memref<16x128xf32, #tpu.memory_space<vmem>>, vector<1x128xf32>
    tpu.vector_store %arg4[%c9, %c0_13], %160 {strides = array<i32>} : memref<16x128xf32, #tpu.memory_space<vmem>>, vector<1x128xf32>,
    %162 = vector.extract_strided_slice %0 {offsets = [8, 0], sizes = [1, 128], strides = [1, 1]} : vector<16x128xf32> to vector<1x128xf32>
    %163 = vector.extract_strided_slice %1 {offsets = [2, 0], sizes = [1, 128], strides = [1, 1]} : vector<16x128xf32> to vector<1x128xf32>
    %164 = arith.mulf %162, %163 : vector<1x128xf32>
    %165 = vector.extract_strided_slice %0 {offsets = [9, 0], sizes = [1, 128], strides = [1, 1]} : vector<16x128xf32> to vector<1x128xf32>
    %166 = vector.extract_strided_slice %1 {offsets = [6, 0], sizes = [1, 128], strides = [1, 1]} : vector<16x128xf32> to vector<1x128xf32>
    %167 = arith.mulf %165, %166 : vector<1x128xf32>
    %168 = arith.addf %164, %167 : vector<1x128xf32>
    %169 = vector.extract_strided_slice %0 {offsets = [10, 0], sizes = [1, 128], strides = [1, 1]} : vector<16x128xf32> to vector<1x128xf32>
    %170 = vector.extract_strided_slice %1 {offsets = [10, 0], sizes = [1, 128], strides = [1, 1]} : vector<16x128xf32> to vector<1x128xf32>
    %171 = arith.mulf %169, %170 : vector<1x128xf32>
    %172 = arith.addf %168, %171 : vector<1x128xf32>
    %173 = vector.extract_strided_slice %0 {offsets = [11, 0], sizes = [1, 128], strides = [1, 1]} : vector<16x128xf32> to vector<1x128xf32>
    %174 = vector.extract_strided_slice %1 {offsets = [14, 0], sizes = [1, 128], strides = [1, 1]} : vector<16x128xf32> to vector<1x128xf32>
    %175 = arith.mulf %173, %174 : vector<1x128xf32>
    %176 = arith.addf %172, %175 : vector<1x128xf32>
    %c10 = arith.constant 10 : index
    %c0_14 = arith.constant 0 : index
    %177 = vector.load %arg4[%c10, %c0_14] : memref<16x128xf32, #tpu.memory_space<vmem>>, vector<1x128xf32>
    tpu.vector_store %arg4[%c10, %c0_14], %176 {strides = array<i32>} : memref<16x128xf32, #tpu.memory_space<vmem>>, vector<1x128xf32>,
    %178 = vector.extract_strided_slice %0 {offsets = [8, 0], sizes = [1, 128], strides = [1, 1]} : vector<16x128xf32> to vector<1x128xf32>
    %179 = vector.extract_strided_slice %1 {offsets = [3, 0], sizes = [1, 128], strides = [1, 1]} : vector<16x128xf32> to vector<1x128xf32>
    %180 = arith.mulf %178, %179 : vector<1x128xf32>
    %181 = vector.extract_strided_slice %0 {offsets = [9, 0], sizes = [1, 128], strides = [1, 1]} : vector<16x128xf32> to vector<1x128xf32>
    %182 = vector.extract_strided_slice %1 {offsets = [7, 0], sizes = [1, 128], strides = [1, 1]} : vector<16x128xf32> to vector<1x128xf32>
    %183 = arith.mulf %181, %182 : vector<1x128xf32>
    %184 = arith.addf %180, %183 : vector<1x128xf32>
    %185 = vector.extract_strided_slice %0 {offsets = [10, 0], sizes = [1, 128], strides = [1, 1]} : vector<16x128xf32> to vector<1x128xf32>
    %186 = vector.extract_strided_slice %1 {offsets = [11, 0], sizes = [1, 128], strides = [1, 1]} : vector<16x128xf32> to vector<1x128xf32>
    %187 = arith.mulf %185, %186 : vector<1x128xf32>
    %188 = arith.addf %184, %187 : vector<1x128xf32>
    %189 = vector.extract_strided_slice %0 {offsets = [11, 0], sizes = [1, 128], strides = [1, 1]} : vector<16x128xf32> to vector<1x128xf32>
    %190 = vector.extract_strided_slice %1 {offsets = [15, 0], sizes = [1, 128], strides = [1, 1]} : vector<16x128xf32> to vector<1x128xf32>
    %191 = arith.mulf %189, %190 : vector<1x128xf32>
    %192 = arith.addf %188, %191 : vector<1x128xf32>
    %c11 = arith.constant 11 : index
    %c0_15 = arith.constant 0 : index
    %193 = vector.load %arg4[%c11, %c0_15] : memref<16x128xf32, #tpu.memory_space<vmem>>, vector<1x128xf32>
    tpu.vector_store %arg4[%c11, %c0_15], %192 {strides = array<i32>} : memref<16x128xf32, #tpu.memory_space<vmem>>, vector<1x128xf32>,
    %194 = vector.extract_strided_slice %0 {offsets = [12, 0], sizes = [1, 128], strides = [1, 1]} : vector<16x128xf32> to vector<1x128xf32>
    %195 = vector.extract_strided_slice %1 {offsets = [0, 0], sizes = [1, 128], strides = [1, 1]} : vector<16x128xf32> to vector<1x128xf32>
    %196 = arith.mulf %194, %195 : vector<1x128xf32>
    %197 = vector.extract_strided_slice %0 {offsets = [13, 0], sizes = [1, 128], strides = [1, 1]} : vector<16x128xf32> to vector<1x128xf32>
    %198 = vector.extract_strided_slice %1 {offsets = [4, 0], sizes = [1, 128], strides = [1, 1]} : vector<16x128xf32> to vector<1x128xf32>
    %199 = arith.mulf %197, %198 : vector<1x128xf32>
    %200 = arith.addf %196, %199 : vector<1x128xf32>
    %201 = vector.extract_strided_slice %0 {offsets = [14, 0], sizes = [1, 128], strides = [1, 1]} : vector<16x128xf32> to vector<1x128xf32>
    %202 = vector.extract_strided_slice %1 {offsets = [8, 0], sizes = [1, 128], strides = [1, 1]} : vector<16x128xf32> to vector<1x128xf32>
    %203 = arith.mulf %201, %202 : vector<1x128xf32>
    %204 = arith.addf %200, %203 : vector<1x128xf32>
    %205 = vector.extract_strided_slice %0 {offsets = [15, 0], sizes = [1, 128], strides = [1, 1]} : vector<16x128xf32> to vector<1x128xf32>
    %206 = vector.extract_strided_slice %1 {offsets = [12, 0], sizes = [1, 128], strides = [1, 1]} : vector<16x128xf32> to vector<1x128xf32>
    %207 = arith.mulf %205, %206 : vector<1x128xf32>
    %208 = arith.addf %204, %207 : vector<1x128xf32>
    %c12 = arith.constant 12 : index
    %c0_16 = arith.constant 0 : index
    %209 = vector.load %arg4[%c12, %c0_16] : memref<16x128xf32, #tpu.memory_space<vmem>>, vector<1x128xf32>
    tpu.vector_store %arg4[%c12, %c0_16], %208 {strides = array<i32>} : memref<16x128xf32, #tpu.memory_space<vmem>>, vector<1x128xf32>,
    %210 = vector.extract_strided_slice %0 {offsets = [12, 0], sizes = [1, 128], strides = [1, 1]} : vector<16x128xf32> to vector<1x128xf32>
    %211 = vector.extract_strided_slice %1 {offsets = [1, 0], sizes = [1, 128], strides = [1, 1]} : vector<16x128xf32> to vector<1x128xf32>
    %212 = arith.mulf %210, %211 : vector<1x128xf32>
    %213 = vector.extract_strided_slice %0 {offsets = [13, 0], sizes = [1, 128], strides = [1, 1]} : vector<16x128xf32> to vector<1x128xf32>
    %214 = vector.extract_strided_slice %1 {offsets = [5, 0], sizes = [1, 128], strides = [1, 1]} : vector<16x128xf32> to vector<1x128xf32>
    %215 = arith.mulf %213, %214 : vector<1x128xf32>
    %216 = arith.addf %212, %215 : vector<1x128xf32>
    %217 = vector.extract_strided_slice %0 {offsets = [14, 0], sizes = [1, 128], strides = [1, 1]} : vector<16x128xf32> to vector<1x128xf32>
    %218 = vector.extract_strided_slice %1 {offsets = [9, 0], sizes = [1, 128], strides = [1, 1]} : vector<16x128xf32> to vector<1x128xf32>
    %219 = arith.mulf %217, %218 : vector<1x128xf32>
    %220 = arith.addf %216, %219 : vector<1x128xf32>
    %221 = vector.extract_strided_slice %0 {offsets = [15, 0], sizes = [1, 128], strides = [1, 1]} : vector<16x128xf32> to vector<1x128xf32>
    %222 = vector.extract_strided_slice %1 {offsets = [13, 0], sizes = [1, 128], strides = [1, 1]} : vector<16x128xf32> to vector<1x128xf32>
    %223 = arith.mulf %221, %222 : vector<1x128xf32>
    %224 = arith.addf %220, %223 : vector<1x128xf32>
    %c13 = arith.constant 13 : index
    %c0_17 = arith.constant 0 : index
    %225 = vector.load %arg4[%c13, %c0_17] : memref<16x128xf32, #tpu.memory_space<vmem>>, vector<1x128xf32>
    tpu.vector_store %arg4[%c13, %c0_17], %224 {strides = array<i32>} : memref<16x128xf32, #tpu.memory_space<vmem>>, vector<1x128xf32>,
    %226 = vector.extract_strided_slice %0 {offsets = [12, 0], sizes = [1, 128], strides = [1, 1]} : vector<16x128xf32> to vector<1x128xf32>
    %227 = vector.extract_strided_slice %1 {offsets = [2, 0], sizes = [1, 128], strides = [1, 1]} : vector<16x128xf32> to vector<1x128xf32>
    %228 = arith.mulf %226, %227 : vector<1x128xf32>
    %229 = vector.extract_strided_slice %0 {offsets = [13, 0], sizes = [1, 128], strides = [1, 1]} : vector<16x128xf32> to vector<1x128xf32>
    %230 = vector.extract_strided_slice %1 {offsets = [6, 0], sizes = [1, 128], strides = [1, 1]} : vector<16x128xf32> to vector<1x128xf32>
    %231 = arith.mulf %229, %230 : vector<1x128xf32>
    %232 = arith.addf %228, %231 : vector<1x128xf32>
    %233 = vector.extract_strided_slice %0 {offsets = [14, 0], sizes = [1, 128], strides = [1, 1]} : vector<16x128xf32> to vector<1x128xf32>
    %234 = vector.extract_strided_slice %1 {offsets = [10, 0], sizes = [1, 128], strides = [1, 1]} : vector<16x128xf32> to vector<1x128xf32>
    %235 = arith.mulf %233, %234 : vector<1x128xf32>
    %236 = arith.addf %232, %235 : vector<1x128xf32>
    %237 = vector.extract_strided_slice %0 {offsets = [15, 0], sizes = [1, 128], strides = [1, 1]} : vector<16x128xf32> to vector<1x128xf32>
    %238 = vector.extract_strided_slice %1 {offsets = [14, 0], sizes = [1, 128], strides = [1, 1]} : vector<16x128xf32> to vector<1x128xf32>
    %239 = arith.mulf %237, %238 : vector<1x128xf32>
    %240 = arith.addf %236, %239 : vector<1x128xf32>
    %c14 = arith.constant 14 : index
    %c0_18 = arith.constant 0 : index
    %241 = vector.load %arg4[%c14, %c0_18] : memref<16x128xf32, #tpu.memory_space<vmem>>, vector<1x128xf32>
    tpu.vector_store %arg4[%c14, %c0_18], %240 {strides = array<i32>} : memref<16x128xf32, #tpu.memory_space<vmem>>, vector<1x128xf32>,
    %242 = vector.extract_strided_slice %0 {offsets = [12, 0], sizes = [1, 128], strides = [1, 1]} : vector<16x128xf32> to vector<1x128xf32>
    %243 = vector.extract_strided_slice %1 {offsets = [3, 0], sizes = [1, 128], strides = [1, 1]} : vector<16x128xf32> to vector<1x128xf32>
    %244 = arith.mulf %242, %243 : vector<1x128xf32>
    %245 = vector.extract_strided_slice %0 {offsets = [13, 0], sizes = [1, 128], strides = [1, 1]} : vector<16x128xf32> to vector<1x128xf32>
    %246 = vector.extract_strided_slice %1 {offsets = [7, 0], sizes = [1, 128], strides = [1, 1]} : vector<16x128xf32> to vector<1x128xf32>
    %247 = arith.mulf %245, %246 : vector<1x128xf32>
    %248 = arith.addf %244, %247 : vector<1x128xf32>
    %249 = vector.extract_strided_slice %0 {offsets = [14, 0], sizes = [1, 128], strides = [1, 1]} : vector<16x128xf32> to vector<1x128xf32>
    %250 = vector.extract_strided_slice %1 {offsets = [11, 0], sizes = [1, 128], strides = [1, 1]} : vector<16x128xf32> to vector<1x128xf32>
    %251 = arith.mulf %249, %250 : vector<1x128xf32>
    %252 = arith.addf %248, %251 : vector<1x128xf32>
    %253 = vector.extract_strided_slice %0 {offsets = [15, 0], sizes = [1, 128], strides = [1, 1]} : vector<16x128xf32> to vector<1x128xf32>
    %254 = vector.extract_strided_slice %1 {offsets = [15, 0], sizes = [1, 128], strides = [1, 1]} : vector<16x128xf32> to vector<1x128xf32>
    %255 = arith.mulf %253, %254 : vector<1x128xf32>
    %256 = arith.addf %252, %255 : vector<1x128xf32>
    %c15 = arith.constant 15 : index
    %c0_19 = arith.constant 0 : index
    %257 = vector.load %arg4[%c15, %c0_19] : memref<16x128xf32, #tpu.memory_space<vmem>>, vector<1x128xf32>
    tpu.vector_store %arg4[%c15, %c0_19], %256 {strides = array<i32>} : memref<16x128xf32, #tpu.memory_space<vmem>>, vector<1x128xf32>,
    %c0_20 = arith.constant 0 : index
    %258 = memref.load %arg1[%c0_20] : memref<16xf32, #tpu.memory_space<smem>>
    %259 = vector.broadcast %258 : f32 to vector<1x128xf32>
    %260 = arith.mulf %259, %16 : vector<1x128xf32>
    %c1_21 = arith.constant 1 : index
    %261 = memref.load %arg1[%c1_21] : memref<16xf32, #tpu.memory_space<smem>>
    %262 = vector.broadcast %261 : f32 to vector<1x128xf32>
    %263 = arith.mulf %262, %80 : vector<1x128xf32>
    %264 = arith.addf %260, %263 : vector<1x128xf32>
    %c2_22 = arith.constant 2 : index
    %265 = memref.load %arg1[%c2_22] : memref<16xf32, #tpu.memory_space<smem>>
    %266 = vector.broadcast %265 : f32 to vector<1x128xf32>
    %267 = arith.mulf %266, %144 : vector<1x128xf32>
    %268 = arith.addf %264, %267 : vector<1x128xf32>
    %c3_23 = arith.constant 3 : index
    %269 = memref.load %arg1[%c3_23] : memref<16xf32, #tpu.memory_space<smem>>
    %270 = vector.broadcast %269 : f32 to vector<1x128xf32>
    %271 = arith.mulf %270, %208 : vector<1x128xf32>
    %272 = arith.addf %268, %271 : vector<1x128xf32>
    %c0_24 = arith.constant 0 : index
    %c0_25 = arith.constant 0 : index
    %273 = vector.load %arg5[%c0_24, %c0_25] : memref<16x128xf32, #tpu.memory_space<vmem>>, vector<1x128xf32>
    tpu.vector_store %arg5[%c0_24, %c0_25], %272 {strides = array<i32>} : memref<16x128xf32, #tpu.memory_space<vmem>>, vector<1x128xf32>,
    %c0_26 = arith.constant 0 : index
    %274 = memref.load %arg1[%c0_26] : memref<16xf32, #tpu.memory_space<smem>>
    %275 = vector.broadcast %274 : f32 to vector<1x128xf32>
    %276 = arith.mulf %275, %32 : vector<1x128xf32>
    %c1_27 = arith.constant 1 : index
    %277 = memref.load %arg1[%c1_27] : memref<16xf32, #tpu.memory_space<smem>>
    %278 = vector.broadcast %277 : f32 to vector<1x128xf32>
    %279 = arith.mulf %278, %96 : vector<1x128xf32>
    %280 = arith.addf %276, %279 : vector<1x128xf32>
    %c2_28 = arith.constant 2 : index
    %281 = memref.load %arg1[%c2_28] : memref<16xf32, #tpu.memory_space<smem>>
    %282 = vector.broadcast %281 : f32 to vector<1x128xf32>
    %283 = arith.mulf %282, %160 : vector<1x128xf32>
    %284 = arith.addf %280, %283 : vector<1x128xf32>
    %c3_29 = arith.constant 3 : index
    %285 = memref.load %arg1[%c3_29] : memref<16xf32, #tpu.memory_space<smem>>
    %286 = vector.broadcast %285 : f32 to vector<1x128xf32>
    %287 = arith.mulf %286, %224 : vector<1x128xf32>
    %288 = arith.addf %284, %287 : vector<1x128xf32>
    %c1_30 = arith.constant 1 : index
    %c0_31 = arith.constant 0 : index
    %289 = vector.load %arg5[%c1_30, %c0_31] : memref<16x128xf32, #tpu.memory_space<vmem>>, vector<1x128xf32>
    tpu.vector_store %arg5[%c1_30, %c0_31], %288 {strides = array<i32>} : memref<16x128xf32, #tpu.memory_space<vmem>>, vector<1x128xf32>,
    %c0_32 = arith.constant 0 : index
    %290 = memref.load %arg1[%c0_32] : memref<16xf32, #tpu.memory_space<smem>>
    %291 = vector.broadcast %290 : f32 to vector<1x128xf32>
    %292 = arith.mulf %291, %48 : vector<1x128xf32>
    %c1_33 = arith.constant 1 : index
    %293 = memref.load %arg1[%c1_33] : memref<16xf32, #tpu.memory_space<smem>>
    %294 = vector.broadcast %293 : f32 to vector<1x128xf32>
    %295 = arith.mulf %294, %112 : vector<1x128xf32>
    %296 = arith.addf %292, %295 : vector<1x128xf32>
    %c2_34 = arith.constant 2 : index
    %297 = memref.load %arg1[%c2_34] : memref<16xf32, #tpu.memory_space<smem>>
    %298 = vector.broadcast %297 : f32 to vector<1x128xf32>
    %299 = arith.mulf %298, %176 : vector<1x128xf32>
    %300 = arith.addf %296, %299 : vector<1x128xf32>
    %c3_35 = arith.constant 3 : index
    %301 = memref.load %arg1[%c3_35] : memref<16xf32, #tpu.memory_space<smem>>
    %302 = vector.broadcast %301 : f32 to vector<1x128xf32>
    %303 = arith.mulf %302, %240 : vector<1x128xf32>
    %304 = arith.addf %300, %303 : vector<1x128xf32>
    %c2_36 = arith.constant 2 : index
    %c0_37 = arith.constant 0 : index
    %305 = vector.load %arg5[%c2_36, %c0_37] : memref<16x128xf32, #tpu.memory_space<vmem>>, vector<1x128xf32>
    tpu.vector_store %arg5[%c2_36, %c0_37], %304 {strides = array<i32>} : memref<16x128xf32, #tpu.memory_space<vmem>>, vector<1x128xf32>,
    %c0_38 = arith.constant 0 : index
    %306 = memref.load %arg1[%c0_38] : memref<16xf32, #tpu.memory_space<smem>>
    %307 = vector.broadcast %306 : f32 to vector<1x128xf32>
    %308 = arith.mulf %307, %64 : vector<1x128xf32>
    %c1_39 = arith.constant 1 : index
    %309 = memref.load %arg1[%c1_39] : memref<16xf32, #tpu.memory_space<smem>>
    %310 = vector.broadcast %309 : f32 to vector<1x128xf32>
    %311 = arith.mulf %310, %128 : vector<1x128xf32>
    %312 = arith.addf %308, %311 : vector<1x128xf32>
    %c2_40 = arith.constant 2 : index
    %313 = memref.load %arg1[%c2_40] : memref<16xf32, #tpu.memory_space<smem>>
    %314 = vector.broadcast %313 : f32 to vector<1x128xf32>
    %315 = arith.mulf %314, %192 : vector<1x128xf32>
    %316 = arith.addf %312, %315 : vector<1x128xf32>
    %c3_41 = arith.constant 3 : index
    %317 = memref.load %arg1[%c3_41] : memref<16xf32, #tpu.memory_space<smem>>
    %318 = vector.broadcast %317 : f32 to vector<1x128xf32>
    %319 = arith.mulf %318, %256 : vector<1x128xf32>
    %320 = arith.addf %316, %319 : vector<1x128xf32>
    %c3_42 = arith.constant 3 : index
    %c0_43 = arith.constant 0 : index
    %321 = vector.load %arg5[%c3_42, %c0_43] : memref<16x128xf32, #tpu.memory_space<vmem>>, vector<1x128xf32>
    tpu.vector_store %arg5[%c3_42, %c0_43], %320 {strides = array<i32>} : memref<16x128xf32, #tpu.memory_space<vmem>>, vector<1x128xf32>,
    %c4_44 = arith.constant 4 : index
    %322 = memref.load %arg1[%c4_44] : memref<16xf32, #tpu.memory_space<smem>>
    %323 = vector.broadcast %322 : f32 to vector<1x128xf32>
    %324 = arith.mulf %323, %16 : vector<1x128xf32>
    %c5_45 = arith.constant 5 : index
    %325 = memref.load %arg1[%c5_45] : memref<16xf32, #tpu.memory_space<smem>>
    %326 = vector.broadcast %325 : f32 to vector<1x128xf32>
    %327 = arith.mulf %326, %80 : vector<1x128xf32>
    %328 = arith.addf %324, %327 : vector<1x128xf32>
    %c6_46 = arith.constant 6 : index
    %329 = memref.load %arg1[%c6_46] : memref<16xf32, #tpu.memory_space<smem>>
    %330 = vector.broadcast %329 : f32 to vector<1x128xf32>
    %331 = arith.mulf %330, %144 : vector<1x128xf32>
    %332 = arith.addf %328, %331 : vector<1x128xf32>
    %c7_47 = arith.constant 7 : index
    %333 = memref.load %arg1[%c7_47] : memref<16xf32, #tpu.memory_space<smem>>
    %334 = vector.broadcast %333 : f32 to vector<1x128xf32>
    %335 = arith.mulf %334, %208 : vector<1x128xf32>
    %336 = arith.addf %332, %335 : vector<1x128xf32>
    %c4_48 = arith.constant 4 : index
    %c0_49 = arith.constant 0 : index
    %337 = vector.load %arg5[%c4_48, %c0_49] : memref<16x128xf32, #tpu.memory_space<vmem>>, vector<1x128xf32>
    tpu.vector_store %arg5[%c4_48, %c0_49], %336 {strides = array<i32>} : memref<16x128xf32, #tpu.memory_space<vmem>>, vector<1x128xf32>,
    %c4_50 = arith.constant 4 : index
    %338 = memref.load %arg1[%c4_50] : memref<16xf32, #tpu.memory_space<smem>>
    %339 = vector.broadcast %338 : f32 to vector<1x128xf32>
    %340 = arith.mulf %339, %32 : vector<1x128xf32>
    %c5_51 = arith.constant 5 : index
    %341 = memref.load %arg1[%c5_51] : memref<16xf32, #tpu.memory_space<smem>>
    %342 = vector.broadcast %341 : f32 to vector<1x128xf32>
    %343 = arith.mulf %342, %96 : vector<1x128xf32>
    %344 = arith.addf %340, %343 : vector<1x128xf32>
    %c6_52 = arith.constant 6 : index
    %345 = memref.load %arg1[%c6_52] : memref<16xf32, #tpu.memory_space<smem>>
    %346 = vector.broadcast %345 : f32 to vector<1x128xf32>
    %347 = arith.mulf %346, %160 : vector<1x128xf32>
    %348 = arith.addf %344, %347 : vector<1x128xf32>
    %c7_53 = arith.constant 7 : index
    %349 = memref.load %arg1[%c7_53] : memref<16xf32, #tpu.memory_space<smem>>
    %350 = vector.broadcast %349 : f32 to vector<1x128xf32>
    %351 = arith.mulf %350, %224 : vector<1x128xf32>
    %352 = arith.addf %348, %351 : vector<1x128xf32>
    %c5_54 = arith.constant 5 : index
    %c0_55 = arith.constant 0 : index
    %353 = vector.load %arg5[%c5_54, %c0_55] : memref<16x128xf32, #tpu.memory_space<vmem>>, vector<1x128xf32>
    tpu.vector_store %arg5[%c5_54, %c0_55], %352 {strides = array<i32>} : memref<16x128xf32, #tpu.memory_space<vmem>>, vector<1x128xf32>,
    %c4_56 = arith.constant 4 : index
    %354 = memref.load %arg1[%c4_56] : memref<16xf32, #tpu.memory_space<smem>>
    %355 = vector.broadcast %354 : f32 to vector<1x128xf32>
    %356 = arith.mulf %355, %48 : vector<1x128xf32>
    %c5_57 = arith.constant 5 : index
    %357 = memref.load %arg1[%c5_57] : memref<16xf32, #tpu.memory_space<smem>>
    %358 = vector.broadcast %357 : f32 to vector<1x128xf32>
    %359 = arith.mulf %358, %112 : vector<1x128xf32>
    %360 = arith.addf %356, %359 : vector<1x128xf32>
    %c6_58 = arith.constant 6 : index
    %361 = memref.load %arg1[%c6_58] : memref<16xf32, #tpu.memory_space<smem>>
    %362 = vector.broadcast %361 : f32 to vector<1x128xf32>
    %363 = arith.mulf %362, %176 : vector<1x128xf32>
    %364 = arith.addf %360, %363 : vector<1x128xf32>
    %c7_59 = arith.constant 7 : index
    %365 = memref.load %arg1[%c7_59] : memref<16xf32, #tpu.memory_space<smem>>
    %366 = vector.broadcast %365 : f32 to vector<1x128xf32>
    %367 = arith.mulf %366, %240 : vector<1x128xf32>
    %368 = arith.addf %364, %367 : vector<1x128xf32>
    %c6_60 = arith.constant 6 : index
    %c0_61 = arith.constant 0 : index
    %369 = vector.load %arg5[%c6_60, %c0_61] : memref<16x128xf32, #tpu.memory_space<vmem>>, vector<1x128xf32>
    tpu.vector_store %arg5[%c6_60, %c0_61], %368 {strides = array<i32>} : memref<16x128xf32, #tpu.memory_space<vmem>>, vector<1x128xf32>,
    %c4_62 = arith.constant 4 : index
    %370 = memref.load %arg1[%c4_62] : memref<16xf32, #tpu.memory_space<smem>>
    %371 = vector.broadcast %370 : f32 to vector<1x128xf32>
    %372 = arith.mulf %371, %64 : vector<1x128xf32>
    %c5_63 = arith.constant 5 : index
    %373 = memref.load %arg1[%c5_63] : memref<16xf32, #tpu.memory_space<smem>>
    %374 = vector.broadcast %373 : f32 to vector<1x128xf32>
    %375 = arith.mulf %374, %128 : vector<1x128xf32>
    %376 = arith.addf %372, %375 : vector<1x128xf32>
    %c6_64 = arith.constant 6 : index
    %377 = memref.load %arg1[%c6_64] : memref<16xf32, #tpu.memory_space<smem>>
    %378 = vector.broadcast %377 : f32 to vector<1x128xf32>
    %379 = arith.mulf %378, %192 : vector<1x128xf32>
    %380 = arith.addf %376, %379 : vector<1x128xf32>
    %c7_65 = arith.constant 7 : index
    %381 = memref.load %arg1[%c7_65] : memref<16xf32, #tpu.memory_space<smem>>
    %382 = vector.broadcast %381 : f32 to vector<1x128xf32>
    %383 = arith.mulf %382, %256 : vector<1x128xf32>
    %384 = arith.addf %380, %383 : vector<1x128xf32>
    %c7_66 = arith.constant 7 : index
    %c0_67 = arith.constant 0 : index
    %385 = vector.load %arg5[%c7_66, %c0_67] : memref<16x128xf32, #tpu.memory_space<vmem>>, vector<1x128xf32>
    tpu.vector_store %arg5[%c7_66, %c0_67], %384 {strides = array<i32>} : memref<16x128xf32, #tpu.memory_space<vmem>>, vector<1x128xf32>,
    %c8_68 = arith.constant 8 : index
    %386 = memref.load %arg1[%c8_68] : memref<16xf32, #tpu.memory_space<smem>>
    %387 = vector.broadcast %386 : f32 to vector<1x128xf32>
    %388 = arith.mulf %387, %16 : vector<1x128xf32>
    %c9_69 = arith.constant 9 : index
    %389 = memref.load %arg1[%c9_69] : memref<16xf32, #tpu.memory_space<smem>>
    %390 = vector.broadcast %389 : f32 to vector<1x128xf32>
    %391 = arith.mulf %390, %80 : vector<1x128xf32>
    %392 = arith.addf %388, %391 : vector<1x128xf32>
    %c10_70 = arith.constant 10 : index
    %393 = memref.load %arg1[%c10_70] : memref<16xf32, #tpu.memory_space<smem>>
    %394 = vector.broadcast %393 : f32 to vector<1x128xf32>
    %395 = arith.mulf %394, %144 : vector<1x128xf32>
    %396 = arith.addf %392, %395 : vector<1x128xf32>
    %c11_71 = arith.constant 11 : index
    %397 = memref.load %arg1[%c11_71] : memref<16xf32, #tpu.memory_space<smem>>
    %398 = vector.broadcast %397 : f32 to vector<1x128xf32>
    %399 = arith.mulf %398, %208 : vector<1x128xf32>
    %400 = arith.addf %396, %399 : vector<1x128xf32>
    %c8_72 = arith.constant 8 : index
    %c0_73 = arith.constant 0 : index
    %401 = vector.load %arg5[%c8_72, %c0_73] : memref<16x128xf32, #tpu.memory_space<vmem>>, vector<1x128xf32>
    tpu.vector_store %arg5[%c8_72, %c0_73], %400 {strides = array<i32>} : memref<16x128xf32, #tpu.memory_space<vmem>>, vector<1x128xf32>,
    %c8_74 = arith.constant 8 : index
    %402 = memref.load %arg1[%c8_74] : memref<16xf32, #tpu.memory_space<smem>>
    %403 = vector.broadcast %402 : f32 to vector<1x128xf32>
    %404 = arith.mulf %403, %32 : vector<1x128xf32>
    %c9_75 = arith.constant 9 : index
    %405 = memref.load %arg1[%c9_75] : memref<16xf32, #tpu.memory_space<smem>>
    %406 = vector.broadcast %405 : f32 to vector<1x128xf32>
    %407 = arith.mulf %406, %96 : vector<1x128xf32>
    %408 = arith.addf %404, %407 : vector<1x128xf32>
    %c10_76 = arith.constant 10 : index
    %409 = memref.load %arg1[%c10_76] : memref<16xf32, #tpu.memory_space<smem>>
    %410 = vector.broadcast %409 : f32 to vector<1x128xf32>
    %411 = arith.mulf %410, %160 : vector<1x128xf32>
    %412 = arith.addf %408, %411 : vector<1x128xf32>
    %c11_77 = arith.constant 11 : index
    %413 = memref.load %arg1[%c11_77] : memref<16xf32, #tpu.memory_space<smem>>
    %414 = vector.broadcast %413 : f32 to vector<1x128xf32>
    %415 = arith.mulf %414, %224 : vector<1x128xf32>
    %416 = arith.addf %412, %415 : vector<1x128xf32>
    %c9_78 = arith.constant 9 : index
    %c0_79 = arith.constant 0 : index
    %417 = vector.load %arg5[%c9_78, %c0_79] : memref<16x128xf32, #tpu.memory_space<vmem>>, vector<1x128xf32>
    tpu.vector_store %arg5[%c9_78, %c0_79], %416 {strides = array<i32>} : memref<16x128xf32, #tpu.memory_space<vmem>>, vector<1x128xf32>,
    %c8_80 = arith.constant 8 : index
    %418 = memref.load %arg1[%c8_80] : memref<16xf32, #tpu.memory_space<smem>>
    %419 = vector.broadcast %418 : f32 to vector<1x128xf32>
    %420 = arith.mulf %419, %48 : vector<1x128xf32>
    %c9_81 = arith.constant 9 : index
    %421 = memref.load %arg1[%c9_81] : memref<16xf32, #tpu.memory_space<smem>>
    %422 = vector.broadcast %421 : f32 to vector<1x128xf32>
    %423 = arith.mulf %422, %112 : vector<1x128xf32>
    %424 = arith.addf %420, %423 : vector<1x128xf32>
    %c10_82 = arith.constant 10 : index
    %425 = memref.load %arg1[%c10_82] : memref<16xf32, #tpu.memory_space<smem>>
    %426 = vector.broadcast %425 : f32 to vector<1x128xf32>
    %427 = arith.mulf %426, %176 : vector<1x128xf32>
    %428 = arith.addf %424, %427 : vector<1x128xf32>
    %c11_83 = arith.constant 11 : index
    %429 = memref.load %arg1[%c11_83] : memref<16xf32, #tpu.memory_space<smem>>
    %430 = vector.broadcast %429 : f32 to vector<1x128xf32>
    %431 = arith.mulf %430, %240 : vector<1x128xf32>
    %432 = arith.addf %428, %431 : vector<1x128xf32>
    %c10_84 = arith.constant 10 : index
    %c0_85 = arith.constant 0 : index
    %433 = vector.load %arg5[%c10_84, %c0_85] : memref<16x128xf32, #tpu.memory_space<vmem>>, vector<1x128xf32>
    tpu.vector_store %arg5[%c10_84, %c0_85], %432 {strides = array<i32>} : memref<16x128xf32, #tpu.memory_space<vmem>>, vector<1x128xf32>,
    %c8_86 = arith.constant 8 : index
    %434 = memref.load %arg1[%c8_86] : memref<16xf32, #tpu.memory_space<smem>>
    %435 = vector.broadcast %434 : f32 to vector<1x128xf32>
    %436 = arith.mulf %435, %64 : vector<1x128xf32>
    %c9_87 = arith.constant 9 : index
    %437 = memref.load %arg1[%c9_87] : memref<16xf32, #tpu.memory_space<smem>>
    %438 = vector.broadcast %437 : f32 to vector<1x128xf32>
    %439 = arith.mulf %438, %128 : vector<1x128xf32>
    %440 = arith.addf %436, %439 : vector<1x128xf32>
    %c10_88 = arith.constant 10 : index
    %441 = memref.load %arg1[%c10_88] : memref<16xf32, #tpu.memory_space<smem>>
    %442 = vector.broadcast %441 : f32 to vector<1x128xf32>
    %443 = arith.mulf %442, %192 : vector<1x128xf32>
    %444 = arith.addf %440, %443 : vector<1x128xf32>
    %c11_89 = arith.constant 11 : index
    %445 = memref.load %arg1[%c11_89] : memref<16xf32, #tpu.memory_space<smem>>
    %446 = vector.broadcast %445 : f32 to vector<1x128xf32>
    %447 = arith.mulf %446, %256 : vector<1x128xf32>
    %448 = arith.addf %444, %447 : vector<1x128xf32>
    %c11_90 = arith.constant 11 : index
    %c0_91 = arith.constant 0 : index
    %449 = vector.load %arg5[%c11_90, %c0_91] : memref<16x128xf32, #tpu.memory_space<vmem>>, vector<1x128xf32>
    tpu.vector_store %arg5[%c11_90, %c0_91], %448 {strides = array<i32>} : memref<16x128xf32, #tpu.memory_space<vmem>>, vector<1x128xf32>,
    %c12_92 = arith.constant 12 : index
    %450 = memref.load %arg1[%c12_92] : memref<16xf32, #tpu.memory_space<smem>>
    %451 = vector.broadcast %450 : f32 to vector<1x128xf32>
    %452 = arith.mulf %451, %16 : vector<1x128xf32>
    %c13_93 = arith.constant 13 : index
    %453 = memref.load %arg1[%c13_93] : memref<16xf32, #tpu.memory_space<smem>>
    %454 = vector.broadcast %453 : f32 to vector<1x128xf32>
    %455 = arith.mulf %454, %80 : vector<1x128xf32>
    %456 = arith.addf %452, %455 : vector<1x128xf32>
    %c14_94 = arith.constant 14 : index
    %457 = memref.load %arg1[%c14_94] : memref<16xf32, #tpu.memory_space<smem>>
    %458 = vector.broadcast %457 : f32 to vector<1x128xf32>
    %459 = arith.mulf %458, %144 : vector<1x128xf32>
    %460 = arith.addf %456, %459 : vector<1x128xf32>
    %c15_95 = arith.constant 15 : index
    %461 = memref.load %arg1[%c15_95] : memref<16xf32, #tpu.memory_space<smem>>
    %462 = vector.broadcast %461 : f32 to vector<1x128xf32>
    %463 = arith.mulf %462, %208 : vector<1x128xf32>
    %464 = arith.addf %460, %463 : vector<1x128xf32>
    %c12_96 = arith.constant 12 : index
    %c0_97 = arith.constant 0 : index
    %465 = vector.load %arg5[%c12_96, %c0_97] : memref<16x128xf32, #tpu.memory_space<vmem>>, vector<1x128xf32>
    tpu.vector_store %arg5[%c12_96, %c0_97], %464 {strides = array<i32>} : memref<16x128xf32, #tpu.memory_space<vmem>>, vector<1x128xf32>,
    %c12_98 = arith.constant 12 : index
    %466 = memref.load %arg1[%c12_98] : memref<16xf32, #tpu.memory_space<smem>>
    %467 = vector.broadcast %466 : f32 to vector<1x128xf32>
    %468 = arith.mulf %467, %32 : vector<1x128xf32>
    %c13_99 = arith.constant 13 : index
    %469 = memref.load %arg1[%c13_99] : memref<16xf32, #tpu.memory_space<smem>>
    %470 = vector.broadcast %469 : f32 to vector<1x128xf32>
    %471 = arith.mulf %470, %96 : vector<1x128xf32>
    %472 = arith.addf %468, %471 : vector<1x128xf32>
    %c14_100 = arith.constant 14 : index
    %473 = memref.load %arg1[%c14_100] : memref<16xf32, #tpu.memory_space<smem>>
    %474 = vector.broadcast %473 : f32 to vector<1x128xf32>
    %475 = arith.mulf %474, %160 : vector<1x128xf32>
    %476 = arith.addf %472, %475 : vector<1x128xf32>
    %c15_101 = arith.constant 15 : index
    %477 = memref.load %arg1[%c15_101] : memref<16xf32, #tpu.memory_space<smem>>
    %478 = vector.broadcast %477 : f32 to vector<1x128xf32>
    %479 = arith.mulf %478, %224 : vector<1x128xf32>
    %480 = arith.addf %476, %479 : vector<1x128xf32>
    %c13_102 = arith.constant 13 : index
    %c0_103 = arith.constant 0 : index
    %481 = vector.load %arg5[%c13_102, %c0_103] : memref<16x128xf32, #tpu.memory_space<vmem>>, vector<1x128xf32>
    tpu.vector_store %arg5[%c13_102, %c0_103], %480 {strides = array<i32>} : memref<16x128xf32, #tpu.memory_space<vmem>>, vector<1x128xf32>,
    %c12_104 = arith.constant 12 : index
    %482 = memref.load %arg1[%c12_104] : memref<16xf32, #tpu.memory_space<smem>>
    %483 = vector.broadcast %482 : f32 to vector<1x128xf32>
    %484 = arith.mulf %483, %48 : vector<1x128xf32>
    %c13_105 = arith.constant 13 : index
    %485 = memref.load %arg1[%c13_105] : memref<16xf32, #tpu.memory_space<smem>>
    %486 = vector.broadcast %485 : f32 to vector<1x128xf32>
    %487 = arith.mulf %486, %112 : vector<1x128xf32>
    %488 = arith.addf %484, %487 : vector<1x128xf32>
    %c14_106 = arith.constant 14 : index
    %489 = memref.load %arg1[%c14_106] : memref<16xf32, #tpu.memory_space<smem>>
    %490 = vector.broadcast %489 : f32 to vector<1x128xf32>
    %491 = arith.mulf %490, %176 : vector<1x128xf32>
    %492 = arith.addf %488, %491 : vector<1x128xf32>
    %c15_107 = arith.constant 15 : index
    %493 = memref.load %arg1[%c15_107] : memref<16xf32, #tpu.memory_space<smem>>
    %494 = vector.broadcast %493 : f32 to vector<1x128xf32>
    %495 = arith.mulf %494, %240 : vector<1x128xf32>
    %496 = arith.addf %492, %495 : vector<1x128xf32>
    %c14_108 = arith.constant 14 : index
    %c0_109 = arith.constant 0 : index
    %497 = vector.load %arg5[%c14_108, %c0_109] : memref<16x128xf32, #tpu.memory_space<vmem>>, vector<1x128xf32>
    tpu.vector_store %arg5[%c14_108, %c0_109], %496 {strides = array<i32>} : memref<16x128xf32, #tpu.memory_space<vmem>>, vector<1x128xf32>,
    %c12_110 = arith.constant 12 : index
    %498 = memref.load %arg1[%c12_110] : memref<16xf32, #tpu.memory_space<smem>>
    %499 = vector.broadcast %498 : f32 to vector<1x128xf32>
    %500 = arith.mulf %499, %64 : vector<1x128xf32>
    %c13_111 = arith.constant 13 : index
    %501 = memref.load %arg1[%c13_111] : memref<16xf32, #tpu.memory_space<smem>>
    %502 = vector.broadcast %501 : f32 to vector<1x128xf32>
    %503 = arith.mulf %502, %128 : vector<1x128xf32>
    %504 = arith.addf %500, %503 : vector<1x128xf32>
    %c14_112 = arith.constant 14 : index
    %505 = memref.load %arg1[%c14_112] : memref<16xf32, #tpu.memory_space<smem>>
    %506 = vector.broadcast %505 : f32 to vector<1x128xf32>
    %507 = arith.mulf %506, %192 : vector<1x128xf32>
    %508 = arith.addf %504, %507 : vector<1x128xf32>
    %c15_113 = arith.constant 15 : index
    %509 = memref.load %arg1[%c15_113] : memref<16xf32, #tpu.memory_space<smem>>
    %510 = vector.broadcast %509 : f32 to vector<1x128xf32>
    %511 = arith.mulf %510, %256 : vector<1x128xf32>
    %512 = arith.addf %508, %511 : vector<1x128xf32>
    %c15_114 = arith.constant 15 : index
    %c0_115 = arith.constant 0 : index
    %513 = vector.load %arg5[%c15_114, %c0_115] : memref<16x128xf32, #tpu.memory_space<vmem>>, vector<1x128xf32>
    tpu.vector_store %arg5[%c15_114, %c0_115], %512 {strides = array<i32>} : memref<16x128xf32, #tpu.memory_space<vmem>>, vector<1x128xf32>,
    return
  }
  func.func @transform_0(%arg0: i32) -> i32 {
    %c0_i32 = arith.constant 0 : i32
    %c0_i32_0 = arith.constant 0 : i32
    return %c0_i32 : i32
  }
  func.func @transform_1(%arg0: i32) -> (i32, i32) {
    %c0_i32 = arith.constant 0 : i32
    %c0_i32_0 = arith.constant 0 : i32
    return %c0_i32, %arg0 : i32, i32
  }
  func.func @transform_2(%arg0: i32) -> (i32, i32) {
    %c0_i32 = arith.constant 0 : i32
    %c0_i32_0 = arith.constant 0 : i32
    return %c0_i32, %arg0 : i32, i32
  }
  func.func @transform_3(%arg0: i32) -> (i32, i32) {
    %c0_i32 = arith.constant 0 : i32
    %c0_i32_0 = arith.constant 0 : i32
    return %c0_i32, %arg0 : i32, i32
  }
  func.func @transform_4(%arg0: i32) -> (i32, i32) {
    %c0_i32 = arith.constant 0 : i32
    %c0_i32_0 = arith.constant 0 : i32
    return %c0_i32, %arg0 : i32, i32
  }
}

</mosaic_0001>

<llo_original>
// kernel: tpu_custom_call.1
$region0: #{tpu_custom_call.1}
  #allocation0 [shape = 'u32[]', space=smem, size = 0x4, offset = 0x4, fixed_abs, tag = 'smem constant byte address 0x4 - core index']
  #allocation1 [shape = 'u32[72,128]{1,0:T(1,128)}', space=vmem, size = 0x9000, scoped, tag = 'internal scratch']
  %s0 = inlined_call_operand.hbm [shape: f32[16], index: 0, kind: input, shape index: {}]
  %s1 = inlined_call_operand.hbm [shape: f32[16,128], index: 1, kind: input, shape index: {}]
  %s2 = inlined_call_operand.hbm [shape: f32[16,128], index: 2, kind: input, shape index: {}]
  %s3 = inlined_call_operand.hbm [shape: f32[16,128], index: 3, kind: output, shape index: {0}]
  %s4 = inlined_call_operand.hbm [shape: f32[16,128], index: 4, kind: output, shape index: {1}]
  %5 = xla_tuple %s3, %s4
  %s6 = sld [smem:[#allocation0]]
  $region42: #{tpu_custom_call.1} parent=0
    _
  %s8 = ssub.s32 1, %s6
  %s9 = scalar_select 0, %s8, %s6
  $region1: #{tpu_custom_call.1} parent=0
    #allocation2 [shape = 'u8[512]{0}', space=smem, size = 0x200, scoped, tag = 'input window, operand 0, single buffered']
    #allocation3 [shape = 's32[1]{0}', space=sflag, size = 0x4, scoped, tag = 'scoped memory for tpu_custom_call.1']
    #allocation4 [shape = 's32[1]{0}', space=sflag, size = 0x4, scoped, tag = 'scoped memory for tpu_custom_call.1']
    #allocation5 [shape = 's32[1]{0}', space=sflag, size = 0x4, scoped, tag = 'scoped memory for tpu_custom_call.1']
    #allocation6 [shape = 'u8[8192]{0}', space=vmem, size = 0x2000, scoped, tag = 'input window, operand 1, single buffered']
    #allocation7 [shape = 'u8[8192]{0}', space=vmem, size = 0x2000, scoped, tag = 'input window, operand 2, single buffered']
    #allocation8 [shape = 's32[1]{0}', space=sflag, size = 0x4, scoped, tag = 'scoped memory for tpu_custom_call.1']
    #allocation9 [shape = 'u8[8192]{0}', space=vmem, size = 0x2000, scoped, tag = 'output window, operand 0, single buffered']
    #allocation10 [shape = 'u8[8192]{0}', space=vmem, size = 0x2000, scoped, tag = 'output window, operand 1, single buffered']
    #allocation11 [shape = 's32[1]{0}', space=sflag, size = 0x4, scoped, tag = 'scoped memory for tpu_custom_call.1']
    %10 = vsyncpa [#allocation5], 0
    %11 = vsyncpa [#allocation3], 0
    %12 = vsyncpa [#allocation8], 0
    %13 = vsyncpa [#allocation4], 0
    %14 = vsyncpa [#allocation11], 0
    // Predicated region
    $region2: #{tpu_custom_call.1} parent=1 // pred_check
      _
    $region3: #{tpu_custom_call.1} parent=1 // pred_check_branch
      %16 = sbr.rel (0) target = $region5
    $region4: #{tpu_custom_call.1} parent=1 // pred_region
      %18 = vsyncadd [#allocation5], 0
      %s20 = sshll.u32 %s0, 4
      %s21 = int_to_ptr.hbm [resolvable:$true] %s20
      %23 = dma.hbm_to_smem %s21, 16, [#allocation2], [#allocation5]
    $region5: #{tpu_custom_call.1} parent=1 // pred_fallthru
      _
    // Predicated region
    $region6: #{tpu_custom_call.1} parent=1 // pred_check
      _
    $region7: #{tpu_custom_call.1} parent=1 // pred_check_branch
      %25 = sbr.rel (0) target = $region9
    $region8: #{tpu_custom_call.1} parent=1 // pred_region
      %27 = vsyncadd [#allocation3], 0
      %s28 = sshll.u32 %s1, 4
      %s29 = int_to_ptr.hbm [resolvable:$true] %s28
      %s30 = sshll.u32 [#allocation6], 4
      %s31 = int_to_ptr.vmem [resolvable:$true] %s30
      %36 = dma.hbm_to_vmem [thread:$0]  %s29, 256, %s31, [#allocation3], 128, 128, 8
    $region9: #{tpu_custom_call.1} parent=1 // pred_fallthru
      _
    // Predicated region
    $region10: #{tpu_custom_call.1} parent=1 // pred_check
      _
    $region11: #{tpu_custom_call.1} parent=1 // pred_check_branch
      %38 = sbr.rel (0) target = $region13
    $region12: #{tpu_custom_call.1} parent=1 // pred_region
      %40 = vsyncadd [#allocation8], 0
      %s41 = sshll.u32 %s2, 4
      %s42 = int_to_ptr.hbm [resolvable:$true] %s41
      %s43 = sshll.u32 [#allocation7], 4
      %s44 = int_to_ptr.vmem [resolvable:$true] %s43
      %49 = dma.hbm_to_vmem [thread:$0]  %s42, 256, %s44, [#allocation8], 128, 128, 8
    $region13: #{tpu_custom_call.1} parent=1 // pred_fallthru
      _
    // Predicated region
    $region14: #{tpu_custom_call.1} parent=1 // pred_check
      _
    $region15: #{tpu_custom_call.1} parent=1 // pred_check_branch
      %51 = sbr.rel (0) target = $region17
    $region16: #{tpu_custom_call.1} parent=1 // pred_region
      %53 = dma.done [#allocation5], 16
    $region17: #{tpu_custom_call.1} parent=1 // pred_fallthru
      _
    // Predicated region
    $region18: #{tpu_custom_call.1} parent=1 // pred_check
      _
    $region19: #{tpu_custom_call.1} parent=1 // pred_check_branch
      %55 = sbr.rel (0) target = $region21
    $region20: #{tpu_custom_call.1} parent=1 // pred_region
      %57 = dma.done [#allocation3], 256
    $region21: #{tpu_custom_call.1} parent=1 // pred_fallthru
      _
    // Predicated region
    $region22: #{tpu_custom_call.1} parent=1 // pred_check
      _
    $region23: #{tpu_custom_call.1} parent=1 // pred_check_branch
      %59 = sbr.rel (0) target = $region25
    $region24: #{tpu_custom_call.1} parent=1 // pred_region
      %61 = dma.done [#allocation8], 256
    $region25: #{tpu_custom_call.1} parent=1 // pred_fallthru
      _
    %62 = sfence
    %v63 = vld [vmem:[#allocation6] sm:$0xff]
    %v64 = vld [vmem:[#allocation6 + $0x8] sm:$0xff]
    %v65 = vld [vmem:[#allocation7] sm:$0xff]
    %v66 = vld [vmem:[#allocation7 + $0x8] sm:$0xff]
    %v67 = vmul.f32 %v63, %v65
    %v69 = vrot.slane %v65, 3
    %v71 = vmul.f32 %v63, %v69
    %v73 = vrot.slane %v71, 1
    %v75 = vadd.f32 %v67, %v73
    %v77 = vrot.slane %v66, 6
    %v79 = vmul.f32 %v63, %v77
    %v81 = vrot.slane %v79, 2
    %v83 = vadd.f32 %v75, %v81
    %v84 = vrot.slane %v66, 1
    %v86 = vmul.f32 %v63, %v84
    %v88 = vrot.slane %v86, 3
    %v90 = vadd.f32 %v83, %v88
    %91 = vst [vmem:[#allocation9] sm:$0x1] %v90
    %v92 = vrot.slane %v65, 1
    %v94 = vmul.f32 %v63, %v92
    %v95 = vrot.slane %v65, 4
    %v97 = vmul.f32 %v63, %v95
    %v99 = vrot.slane %v97, 1
    %v101 = vadd.f32 %v94, %v99
    %v102 = vrot.slane %v66, 7
    %v104 = vmul.f32 %v63, %v102
    %v106 = vrot.slane %v104, 2
    %v108 = vadd.f32 %v101, %v106
    %v109 = vrot.slane %v66, 2
    %v111 = vmul.f32 %v63, %v109
    %v113 = vrot.slane %v111, 3
    %v115 = vadd.f32 %v108, %v113
    %116 = vst [vmem:[#allocation9 + $0x1] sm:$0x1] %v115
    %v117 = vrot.slane %v65, 2
    %v119 = vmul.f32 %v63, %v117
    %v120 = vrot.slane %v65, 5
    %v122 = vmul.f32 %v63, %v120
    %v124 = vrot.slane %v122, 1
    %v126 = vadd.f32 %v119, %v124
    %v127 = vmul.f32 %v63, %v66
    %v129 = vrot.slane %v127, 2
    %v131 = vadd.f32 %v126, %v129
    %v132 = vrot.slane %v66, 3
    %v134 = vmul.f32 %v63, %v132
    %v136 = vrot.slane %v134, 3
    %v138 = vadd.f32 %v131, %v136
    %139 = vst [vmem:[#allocation9 + $0x2] sm:$0x1] %v138
    %v140 = vrot.slane %v65, 6
    %v142 = vmul.f32 %v63, %v140
    %v144 = vrot.slane %v142, 1
    %v146 = vadd.f32 %v71, %v144
    %v147 = vrot.slane %v86, 2
    %v149 = vadd.f32 %v146, %v147
    %v150 = vrot.slane %v66, 4
    %v152 = vmul.f32 %v63, %v150
    %v154 = vrot.slane %v152, 3
    %v156 = vadd.f32 %v149, %v154
    %157 = vst [vmem:[#allocation9 + $0x3] sm:$0x1] %v156
    %v158 = vrot.slane %v65, 7
    %v160 = vmul.f32 %v63, %v158
    %v162 = vrot.slane %v160, 1
    %v164 = vadd.f32 %v97, %v162
    %v165 = vrot.slane %v111, 2
    %v167 = vadd.f32 %v164, %v165
    %v168 = vrot.slane %v66, 5
    %v170 = vmul.f32 %v63, %v168
    %v172 = vrot.slane %v170, 3
    %v174 = vadd.f32 %v167, %v172
    %175 = vst [vmem:[#allocation9] sm:$0x10] %v174
    %v177 = vrot.slane %v67, 1
    %v179 = vadd.f32 %v122, %v177
    %v180 = vrot.slane %v134, 2
    %v182 = vadd.f32 %v179, %v180
    %v183 = vrot.slane %v79, 3
    %v185 = vadd.f32 %v182, %v183
    %186 = vst [vmem:[#allocation9 + $0x1] sm:$0x10] %v185
    %v188 = vrot.slane %v94, 1
    %v190 = vadd.f32 %v142, %v188
    %v191 = vrot.slane %v152, 2
    %v193 = vadd.f32 %v190, %v191
    %v194 = vrot.slane %v104, 3
    %v196 = vadd.f32 %v193, %v194
    %197 = vst [vmem:[#allocation9 + $0x2] sm:$0x10] %v196
    %v199 = vrot.slane %v119, 1
    %v201 = vadd.f32 %v160, %v199
    %v202 = vrot.slane %v170, 2
    %v204 = vadd.f32 %v201, %v202
    %v205 = vrot.slane %v127, 3
    %v207 = vadd.f32 %v204, %v205
    %208 = vst [vmem:[#allocation9 + $0x3] sm:$0x10] %v207
    %v209 = vmul.f32 %v64, %v65
    %v210 = vmul.f32 %v64, %v69
    %v212 = vrot.slane %v210, 1
    %v214 = vadd.f32 %v209, %v212
    %v215 = vmul.f32 %v64, %v77
    %v217 = vrot.slane %v215, 2
    %v219 = vadd.f32 %v214, %v217
    %v220 = vmul.f32 %v64, %v84
    %v222 = vrot.slane %v220, 3
    %v224 = vadd.f32 %v219, %v222
    %225 = vst [vmem:[#allocation9 + $0x8] sm:$0x1] %v224
    %v226 = vmul.f32 %v64, %v92
    %v227 = vmul.f32 %v64, %v95
    %v229 = vrot.slane %v227, 1
    %v231 = vadd.f32 %v226, %v229
    %v232 = vmul.f32 %v64, %v102
    %v234 = vrot.slane %v232, 2
    %v236 = vadd.f32 %v231, %v234
    %v237 = vmul.f32 %v64, %v109
    %v239 = vrot.slane %v237, 3
    %v241 = vadd.f32 %v236, %v239
    %242 = vst [vmem:[#allocation9 + $0x9] sm:$0x1] %v241
    %v243 = vmul.f32 %v64, %v117
    %v244 = vmul.f32 %v64, %v120
    %v246 = vrot.slane %v244, 1
    %v248 = vadd.f32 %v243, %v246
    %v249 = vmul.f32 %v64, %v66
    %v251 = vrot.slane %v249, 2
    %v253 = vadd.f32 %v248, %v251
    %v254 = vmul.f32 %v64, %v132
    %v256 = vrot.slane %v254, 3
    %v258 = vadd.f32 %v253, %v256
    %259 = vst [vmem:[#allocation9 + $0xa] sm:$0x1] %v258
    %v260 = vmul.f32 %v64, %v140
    %v262 = vrot.slane %v260, 1
    %v264 = vadd.f32 %v210, %v262
    %v265 = vrot.slane %v220, 2
    %v267 = vadd.f32 %v264, %v265
    %v268 = vmul.f32 %v64, %v150
    %v270 = vrot.slane %v268, 3
    %v272 = vadd.f32 %v267, %v270
    %273 = vst [vmem:[#allocation9 + $0xb] sm:$0x1] %v272
    %v274 = vmul.f32 %v64, %v158
    %v276 = vrot.slane %v274, 1
    %v278 = vadd.f32 %v227, %v276
    %v279 = vrot.slane %v237, 2
    %v281 = vadd.f32 %v278, %v279
    %v282 = vmul.f32 %v64, %v168
    %v284 = vrot.slane %v282, 3
    %v286 = vadd.f32 %v281, %v284
    %287 = vst [vmem:[#allocation9 + $0x8] sm:$0x10] %v286
    %v289 = vrot.slane %v209, 1
    %v291 = vadd.f32 %v244, %v289
    %v292 = vrot.slane %v254, 2
    %v294 = vadd.f32 %v291, %v292
    %v295 = vrot.slane %v215, 3
    %v297 = vadd.f32 %v294, %v295
    %298 = vst [vmem:[#allocation9 + $0x9] sm:$0x10] %v297
    %v300 = vrot.slane %v226, 1
    %v302 = vadd.f32 %v260, %v300
    %v303 = vrot.slane %v268, 2
    %v305 = vadd.f32 %v302, %v303
    %v306 = vrot.slane %v232, 3
    %v308 = vadd.f32 %v305, %v306
    %309 = vst [vmem:[#allocation9 + $0xa] sm:$0x10] %v308
    %v311 = vrot.slane %v243, 1
    %v313 = vadd.f32 %v274, %v311
    %v314 = vrot.slane %v282, 2
    %v316 = vadd.f32 %v313, %v314
    %v317 = vrot.slane %v249, 3
    %v319 = vadd.f32 %v316, %v317
    %320 = vst [vmem:[#allocation9 + $0xb] sm:$0x10] %v319
    %s321 = sld [smem:[#allocation2]]
    %v322 = vstv %s321
    %v323 = vmul.f32 %v322, %v90
    %s324 = sld [smem:[#allocation2 + $0x1]]
    %v325 = vstv %s324
    %v326 = vmul.f32 %v325, %v174
    %v328 = vrot.slane %v326, 4
    %v330 = vadd.f32 %v323, %v328
    %s331 = sld [smem:[#allocation2 + $0x2]]
    %v332 = vstv %s331
    %v333 = vmul.f32 %v332, %v224
    %v334 = vadd.f32 %v330, %v333
    %s335 = sld [smem:[#allocation2 + $0x3]]
    %v336 = vstv %s335
    %v337 = vmul.f32 %v336, %v286
    %v339 = vrot.slane %v337, 4
    %v341 = vadd.f32 %v334, %v339
    %342 = vst [vmem:[#allocation10] sm:$0x1] %v341
    %s343 = sld [smem:[#allocation2]]
    %v344 = vstv %s343
    %v345 = vmul.f32 %v344, %v115
    %s346 = sld [smem:[#allocation2 + $0x1]]
    %v347 = vstv %s346
    %v348 = vmul.f32 %v347, %v185
    %v350 = vrot.slane %v348, 4
    %v352 = vadd.f32 %v345, %v350
    %s353 = sld [smem:[#allocation2 + $0x2]]
    %v354 = vstv %s353
    %v355 = vmul.f32 %v354, %v241
    %v356 = vadd.f32 %v352, %v355
    %s357 = sld [smem:[#allocation2 + $0x3]]
    %v358 = vstv %s357
    %v359 = vmul.f32 %v358, %v297
    %v361 = vrot.slane %v359, 4
    %v363 = vadd.f32 %v356, %v361
    %364 = vst [vmem:[#allocation10 + $0x1] sm:$0x1] %v363
    %s365 = sld [smem:[#allocation2]]
    %v366 = vstv %s365
    %v367 = vmul.f32 %v366, %v138
    %s368 = sld [smem:[#allocation2 + $0x1]]
    %v369 = vstv %s368
    %v370 = vmul.f32 %v369, %v196
    %v372 = vrot.slane %v370, 4
    %v374 = vadd.f32 %v367, %v372
    %s375 = sld [smem:[#allocation2 + $0x2]]
    %v376 = vstv %s375
    %v377 = vmul.f32 %v376, %v258
    %v378 = vadd.f32 %v374, %v377
    %s379 = sld [smem:[#allocation2 + $0x3]]
    %v380 = vstv %s379
    %v381 = vmul.f32 %v380, %v308
    %v383 = vrot.slane %v381, 4
    %v385 = vadd.f32 %v378, %v383
    %386 = vst [vmem:[#allocation10 + $0x2] sm:$0x1] %v385
    %s387 = sld [smem:[#allocation2]]
    %v388 = vstv %s387
    %v389 = vmul.f32 %v388, %v156
    %s390 = sld [smem:[#allocation2 + $0x1]]
    %v391 = vstv %s390
    %v392 = vmul.f32 %v391, %v207
    %v394 = vrot.slane %v392, 4
    %v396 = vadd.f32 %v389, %v394
    %s397 = sld [smem:[#allocation2 + $0x2]]
    %v398 = vstv %s397
    %v399 = vmul.f32 %v398, %v272
    %v400 = vadd.f32 %v396, %v399
    %s401 = sld [smem:[#allocation2 + $0x3]]
    %v402 = vstv %s401
    %v403 = vmul.f32 %v402, %v319
    %v405 = vrot.slane %v403, 4
    %v407 = vadd.f32 %v400, %v405
    %408 = vst [vmem:[#allocation10 + $0x3] sm:$0x1] %v407
    %s409 = sld [smem:[#allocation2 + $0x4]]
    %v410 = vstv %s409
    %v411 = vmul.f32 %v410, %v90
    %s412 = sld [smem:[#allocation2 + $0x5]]
    %v413 = vstv %s412
    %v414 = vmul.f32 %v413, %v174
    %v416 = vrot.slane %v414, 4
    %v418 = vadd.f32 %v411, %v416
    %s419 = sld [smem:[#allocation2 + $0x6]]
    %v420 = vstv %s419
    %v421 = vmul.f32 %v420, %v224
    %v422 = vadd.f32 %v418, %v421
    %s423 = sld [smem:[#allocation2 + $0x7]]
    %v424 = vstv %s423
    %v425 = vmul.f32 %v424, %v286
    %v427 = vrot.slane %v425, 4
    %v429 = vadd.f32 %v422, %v427
    %430 = vst [vmem:[#allocation10 + $0x4] sm:$0x1] %v429
    %s431 = sld [smem:[#allocation2 + $0x4]]
    %v432 = vstv %s431
    %v433 = vmul.f32 %v432, %v115
    %s434 = sld [smem:[#allocation2 + $0x5]]
    %v435 = vstv %s434
    %v436 = vmul.f32 %v435, %v185
    %v438 = vrot.slane %v436, 4
    %v440 = vadd.f32 %v433, %v438
    %s441 = sld [smem:[#allocation2 + $0x6]]
    %v442 = vstv %s441
    %v443 = vmul.f32 %v442, %v241
    %v444 = vadd.f32 %v440, %v443
    %s445 = sld [smem:[#allocation2 + $0x7]]
    %v446 = vstv %s445
    %v447 = vmul.f32 %v446, %v297
    %v449 = vrot.slane %v447, 4
    %v451 = vadd.f32 %v444, %v449
    %452 = vst [vmem:[#allocation10 + $0x5] sm:$0x1] %v451
    %s453 = sld [smem:[#allocation2 + $0x4]]
    %v454 = vstv %s453
    %v455 = vmul.f32 %v454, %v138
    %s456 = sld [smem:[#allocation2 + $0x5]]
    %v457 = vstv %s456
    %v458 = vmul.f32 %v457, %v196
    %v460 = vrot.slane %v458, 4
    %v462 = vadd.f32 %v455, %v460
    %s463 = sld [smem:[#allocation2 + $0x6]]
    %v464 = vstv %s463
    %v465 = vmul.f32 %v464, %v258
    %v466 = vadd.f32 %v462, %v465
    %s467 = sld [smem:[#allocation2 + $0x7]]
    %v468 = vstv %s467
    %v469 = vmul.f32 %v468, %v308
    %v471 = vrot.slane %v469, 4
    %v473 = vadd.f32 %v466, %v471
    %474 = vst [vmem:[#allocation10 + $0x6] sm:$0x1] %v473
    %s475 = sld [smem:[#allocation2 + $0x4]]
    %v476 = vstv %s475
    %v477 = vmul.f32 %v476, %v156
    %s478 = sld [smem:[#allocation2 + $0x5]]
    %v479 = vstv %s478
    %v480 = vmul.f32 %v479, %v207
    %v482 = vrot.slane %v480, 4
    %v484 = vadd.f32 %v477, %v482
    %s485 = sld [smem:[#allocation2 + $0x6]]
    %v486 = vstv %s485
    %v487 = vmul.f32 %v486, %v272
    %v488 = vadd.f32 %v484, %v487
    %s489 = sld [smem:[#allocation2 + $0x7]]
    %v490 = vstv %s489
    %v491 = vmul.f32 %v490, %v319
    %v493 = vrot.slane %v491, 4
    %v495 = vadd.f32 %v488, %v493
    %496 = vst [vmem:[#allocation10 + $0x7] sm:$0x1] %v495
    %s497 = sld [smem:[#allocation2 + $0x8]]
    %v498 = vstv %s497
    %v499 = vmul.f32 %v498, %v90
    %s500 = sld [smem:[#allocation2 + $0x9]]
    %v501 = vstv %s500
    %v502 = vmul.f32 %v501, %v174
    %v504 = vrot.slane %v502, 4
    %v506 = vadd.f32 %v499, %v504
    %s507 = sld [smem:[#allocation2 + $0xa]]
    %v508 = vstv %s507
    %v509 = vmul.f32 %v508, %v224
    %v510 = vadd.f32 %v506, %v509
    %s511 = sld [smem:[#allocation2 + $0xb]]
    %v512 = vstv %s511
    %v513 = vmul.f32 %v512, %v286
    %v515 = vrot.slane %v513, 4
    %v517 = vadd.f32 %v510, %v515
    %518 = vst [vmem:[#allocation10 + $0x8] sm:$0x1] %v517
    %s519 = sld [smem:[#allocation2 + $0x8]]
    %v520 = vstv %s519
    %v521 = vmul.f32 %v520, %v115
    %s522 = sld [smem:[#allocation2 + $0x9]]
    %v523 = vstv %s522
    %v524 = vmul.f32 %v523, %v185
    %v526 = vrot.slane %v524, 4
    %v528 = vadd.f32 %v521, %v526
    %s529 = sld [smem:[#allocation2 + $0xa]]
    %v530 = vstv %s529
    %v531 = vmul.f32 %v530, %v241
    %v532 = vadd.f32 %v528, %v531
    %s533 = sld [smem:[#allocation2 + $0xb]]
    %v534 = vstv %s533
    %v535 = vmul.f32 %v534, %v297
    %v537 = vrot.slane %v535, 4
    %v539 = vadd.f32 %v532, %v537
    %540 = vst [vmem:[#allocation10 + $0x9] sm:$0x1] %v539
    %s541 = sld [smem:[#allocation2 + $0x8]]
    %v542 = vstv %s541
    %v543 = vmul.f32 %v542, %v138
    %s544 = sld [smem:[#allocation2 + $0x9]]
    %v545 = vstv %s544
    %v546 = vmul.f32 %v545, %v196
    %v548 = vrot.slane %v546, 4
    %v550 = vadd.f32 %v543, %v548
    %s551 = sld [smem:[#allocation2 + $0xa]]
    %v552 = vstv %s551
    %v553 = vmul.f32 %v552, %v258
    %v554 = vadd.f32 %v550, %v553
    %s555 = sld [smem:[#allocation2 + $0xb]]
    %v556 = vstv %s555
    %v557 = vmul.f32 %v556, %v308
    %v559 = vrot.slane %v557, 4
    %v561 = vadd.f32 %v554, %v559
    %562 = vst [vmem:[#allocation10 + $0xa] sm:$0x1] %v561
    %s563 = sld [smem:[#allocation2 + $0x8]]
    %v564 = vstv %s563
    %v565 = vmul.f32 %v564, %v156
    %s566 = sld [smem:[#allocation2 + $0x9]]
    %v567 = vstv %s566
    %v568 = vmul.f32 %v567, %v207
    %v570 = vrot.slane %v568, 4
    %v572 = vadd.f32 %v565, %v570
    %s573 = sld [smem:[#allocation2 + $0xa]]
    %v574 = vstv %s573
    %v575 = vmul.f32 %v574, %v272
    %v576 = vadd.f32 %v572, %v575
    %s577 = sld [smem:[#allocation2 + $0xb]]
    %v578 = vstv %s577
    %v579 = vmul.f32 %v578, %v319
    %v581 = vrot.slane %v579, 4
    %v583 = vadd.f32 %v576, %v581
    %584 = vst [vmem:[#allocation10 + $0xb] sm:$0x1] %v583
    %s585 = sld [smem:[#allocation2 + $0xc]]
    %v586 = vstv %s585
    %v587 = vmul.f32 %v586, %v90
    %s588 = sld [smem:[#allocation2 + $0xd]]
    %v589 = vstv %s588
    %v590 = vmul.f32 %v589, %v174
    %v592 = vrot.slane %v590, 4
    %v594 = vadd.f32 %v587, %v592
    %s595 = sld [smem:[#allocation2 + $0xe]]
    %v596 = vstv %s595
    %v597 = vmul.f32 %v596, %v224
    %v598 = vadd.f32 %v594, %v597
    %s599 = sld [smem:[#allocation2 + $0xf]]
    %v600 = vstv %s599
    %v601 = vmul.f32 %v600, %v286
    %v603 = vrot.slane %v601, 4
    %v605 = vadd.f32 %v598, %v603
    %606 = vst [vmem:[#allocation10 + $0xc] sm:$0x1] %v605
    %s607 = sld [smem:[#allocation2 + $0xc]]
    %v608 = vstv %s607
    %v609 = vmul.f32 %v608, %v115
    %s610 = sld [smem:[#allocation2 + $0xd]]
    %v611 = vstv %s610
    %v612 = vmul.f32 %v611, %v185
    %v614 = vrot.slane %v612, 4
    %v616 = vadd.f32 %v609, %v614
    %s617 = sld [smem:[#allocation2 + $0xe]]
    %v618 = vstv %s617
    %v619 = vmul.f32 %v618, %v241
    %v620 = vadd.f32 %v616, %v619
    %s621 = sld [smem:[#allocation2 + $0xf]]
    %v622 = vstv %s621
    %v623 = vmul.f32 %v622, %v297
    %v625 = vrot.slane %v623, 4
    %v627 = vadd.f32 %v620, %v625
    %628 = vst [vmem:[#allocation10 + $0xd] sm:$0x1] %v627
    %s629 = sld [smem:[#allocation2 + $0xc]]
    %v630 = vstv %s629
    %v631 = vmul.f32 %v630, %v138
    %s632 = sld [smem:[#allocation2 + $0xd]]
    %v633 = vstv %s632
    %v634 = vmul.f32 %v633, %v196
    %v636 = vrot.slane %v634, 4
    %v638 = vadd.f32 %v631, %v636
    %s639 = sld [smem:[#allocation2 + $0xe]]
    %v640 = vstv %s639
    %v641 = vmul.f32 %v640, %v258
    %v642 = vadd.f32 %v638, %v641
    %s643 = sld [smem:[#allocation2 + $0xf]]
    %v644 = vstv %s643
    %v645 = vmul.f32 %v644, %v308
    %v647 = vrot.slane %v645, 4
    %v649 = vadd.f32 %v642, %v647
    %650 = vst [vmem:[#allocation10 + $0xe] sm:$0x1] %v649
    %s651 = sld [smem:[#allocation2 + $0xc]]
    %v652 = vstv %s651
    %v653 = vmul.f32 %v652, %v156
    %s654 = sld [smem:[#allocation2 + $0xd]]
    %v655 = vstv %s654
    %v656 = vmul.f32 %v655, %v207
    %v658 = vrot.slane %v656, 4
    %v660 = vadd.f32 %v653, %v658
    %s661 = sld [smem:[#allocation2 + $0xe]]
    %v662 = vstv %s661
    %v663 = vmul.f32 %v662, %v272
    %v664 = vadd.f32 %v660, %v663
    %s665 = sld [smem:[#allocation2 + $0xf]]
    %v666 = vstv %s665
    %v667 = vmul.f32 %v666, %v319
    %v669 = vrot.slane %v667, 4
    %v671 = vadd.f32 %v664, %v669
    %672 = vst [vmem:[#allocation10 + $0xf] sm:$0x1] %v671
    // Predicated region
    $region26: #{tpu_custom_call.1} parent=1 // pred_check
      _
    $region27: #{tpu_custom_call.1} parent=1 // pred_check_branch
      %674 = sbr.rel (0) target = $region29
    $region28: #{tpu_custom_call.1} parent=1 // pred_region
      %676 = vsyncadd [#allocation4], 0
      %s677 = sshll.u32 [#allocation9], 4
      %s678 = int_to_ptr.vmem [resolvable:$true] %s677
      %s679 = sshll.u32 %s3, 4
      %s680 = int_to_ptr.hbm [resolvable:$true] %s679
      %685 = dma.vmem_to_hbm [thread:$0]  %s678, 256, %s680, [#allocation4], 128, 128, 8
    $region29: #{tpu_custom_call.1} parent=1 // pred_fallthru
      _
    // Predicated region
    $region30: #{tpu_custom_call.1} parent=1 // pred_check
      _
    $region31: #{tpu_custom_call.1} parent=1 // pred_check_branch
      %687 = sbr.rel (0) target = $region33
    $region32: #{tpu_custom_call.1} parent=1 // pred_region
      %689 = vsyncadd [#allocation11], 0
      %s690 = sshll.u32 [#allocation10], 4
      %s691 = int_to_ptr.vmem [resolvable:$true] %s690
      %s692 = sshll.u32 %s4, 4
      %s693 = int_to_ptr.hbm [resolvable:$true] %s692
      %698 = dma.vmem_to_hbm [thread:$0]  %s691, 256, %s693, [#allocation11], 128, 128, 8
    $region33: #{tpu_custom_call.1} parent=1 // pred_fallthru
      _
    // Predicated region
    $region34: #{tpu_custom_call.1} parent=1 // pred_check
      _
    $region35: #{tpu_custom_call.1} parent=1 // pred_check_branch
      %700 = sbr.rel (0) target = $region37
    $region36: #{tpu_custom_call.1} parent=1 // pred_region
      %702 = dma.done [#allocation4], 256
    $region37: #{tpu_custom_call.1} parent=1 // pred_fallthru
      _
    // Predicated region
    $region38: #{tpu_custom_call.1} parent=1 // pred_check
      _
    $region39: #{tpu_custom_call.1} parent=1 // pred_check_branch
      %704 = sbr.rel (0) target = $region41
    $region40: #{tpu_custom_call.1} parent=1 // pred_region
      %706 = dma.done [#allocation11], 256
    $region41: #{tpu_custom_call.1} parent=1 // pred_fallthru
      _
    %707 = vsyncpa [#allocation3], 1
    %708 = vsyncpa [#allocation8], 1
    %709 = vsyncpa [#allocation4], 1
    %710 = vsyncpa [#allocation11], 1
    %711 = vsyncpa [#allocation5], 1

</llo_original>
